<compile_context>
chip_gen: v5e
topology: v5e:2x2
jax: 0.10.0
libtpu: 0.0.40
codegen_flags: <defaults>
</compile_context>

<pallas_src>
import functools
from typing import NamedTuple

import jax
import jax.numpy as jnp
import numpy as np
from jax.experimental import pallas as pl
from jax.experimental.pallas import tpu as pltpu

LANE = 128
SUBLANE = 8


def _round_up(v, m):
    return (v + m - 1) // m * m


class Meta(NamedTuple):
    """Static layout metadata from prepare_params (hashable -> jit static arg)."""
    ksize: int
    cin: int
    c1: int
    c2: int
    p1h: int
    p1w: int
    ph2: int
    pw2: int
    g: int          # lane width of one conv2 pool-offset column group (128-pad)
    kcol_pad: int   # lane width of the conv1 im2col operand (128-pad)
    fcpad: int
    outpad: int
    ncls: int


# ----------------------------------------------------------------------------
# Fused Pallas kernel: conv1+relu+pool -> conv2+relu+pool -> fc1+relu -> fc2
# ----------------------------------------------------------------------------
def fused_lenet5_kernel(a1_ref, w1_ref, b1_ref, w2_ref, b2_ref,
                        wd1_ref, bd1_ref, wd2_ref, bd2_ref, o_ref,
                        *, nb, p1h, g):
    cdt = w2_ref.dtype  # MXU operand dtype (f32 or bf16); accumulation is f32

    # --- conv1: ONE matmul covering all four 2x2-pool offsets ---------------
    # a1 rows: (pool_offset, pooled_y, batch); cols: (pooled_x, K1).
    # w1 is block-diagonal over pooled_x, so y1 cols are (pooled_x, channel).
    y1 = jnp.dot(a1_ref[...], w1_ref[...], preferred_element_type=jnp.float32)
    rows = p1h * nb
    m = y1[0:rows]
    for p in range(1, 4):                              # 2x2 max-pool (rows)
        m = jnp.maximum(m, y1[p * rows:(p + 1) * rows])
    h1 = jnp.maximum(m + b1_ref[...], 0.0)             # (p1h*nb, p1w*c1), f32

    # --- conv2: fuse the p1h row blocks into ONE matmul (K = p1h*p1w*c1) ----
    h1cat = jnp.concatenate([h1[y * nb:(y + 1) * nb] for y in range(p1h)],
                            axis=-1)                   # (nb, p1h*p1w*c1)
    z = jnp.dot(h1cat.astype(cdt), w2_ref[...],
                preferred_element_type=jnp.float32)    # (nb, 4*g)

    # --- 2x2 max-pool = max over the four lane-aligned pool-offset groups ---
    zm = jnp.maximum(jnp.maximum(z[:, 0:g], z[:, g:2 * g]),
                     jnp.maximum(z[:, 2 * g:3 * g], z[:, 3 * g:4 * g]))
    h2 = jnp.maximum(zm + b2_ref[...], 0.0)            # (nb, g), f32

    # --- dense1 + ReLU, dense2 (bias/ReLU on the VPU in f32) -----------------
    d1 = jnp.dot(h2.astype(cdt), wd1_ref[...], preferred_element_type=jnp.float32)
    d1 = jnp.maximum(d1 + bd1_ref[...], 0.0)
    out = jnp.dot(d1.astype(cdt), wd2_ref[...], preferred_element_type=jnp.float32)
    o_ref[...] = (out + bd2_ref[...]).astype(o_ref.dtype)  # full (nb,128k) tile


# ----------------------------------------------------------------------------
# One-time weight repack (host-side numpy; call once, reuse across forwards)
# ----------------------------------------------------------------------------
def prepare_params(params, input_size, compute_dtype=jnp.float32):
    w1 = np.asarray(params["w1"], np.float32)    # (K, K, cin, c1)  HWIO
    b1 = np.asarray(params["b1"], np.float32)
    w2 = np.asarray(params["w2"], np.float32)    # (K, K, c1, c2)
    b2 = np.asarray(params["b2"], np.float32)
    wd1 = np.asarray(params["wd1"], np.float32)  # (flat_fts, fc)
    bd1 = np.asarray(params["bd1"], np.float32)
    wd2 = np.asarray(params["wd2"], np.float32)  # (fc, ncls)
    bd2 = np.asarray(params["bd2"], np.float32)

    ksize, _, cin, c1 = w1.shape
    c2 = w2.shape[3]
    fc = wd1.shape[1]
    ncls = wd2.shape[1]
    _, h, w = input_size

    oh1, ow1 = h - ksize + 1, w - ksize + 1
    p1h, p1w = oh1 // 2, ow1 // 2                  # conv1 pooled map
    oh2, ow2 = p1h - ksize + 1, p1w - ksize + 1    # conv2 pre-pool map
    ph2, pw2 = oh2 // 2, ow2 // 2                  # conv2 pooled map
    assert ph2 >= 1 and pw2 >= 1, "input too small for two conv+pool stages"
    assert wd1.shape[0] == c2 * ph2 * pw2, "fc1 in-features mismatch"

    k1 = ksize * ksize * cin
    kcol = p1w * k1
    kcol_pad = _round_up(kcol, LANE)
    g = _round_up(ph2 * pw2 * c2, LANE)
    fcpad = _round_up(fc, LANE)
    outpad = _round_up(ncls, LANE)

    # conv1 weight: block-diagonal over pooled-x so matmul cols are (x, c1).
    w1flat = w1.reshape(k1, c1)
    w1bd = np.zeros((kcol_pad, p1w * c1), np.float32)
    for x in range(p1w):
        w1bd[x * k1:(x + 1) * k1, x * c1:(x + 1) * c1] = w1flat
    b1big = np.tile(b1, p1w).reshape(1, p1w * c1)

    # conv2 folded to (y, x, c1) x (pool_offset | py, px, c2) with the four
    # pool-offset column groups each padded ONCE to g lanes.
    big = np.zeros((p1h, p1w, c1, 4, g), np.float32)
    for dy in range(2):
        for dx in range(2):
            d = dy * 2 + dx
            for py in range(ph2):
                for px in range(pw2):
                    iy, ix = 2 * py + dy, 2 * px + dx      # conv2 output pos
                    col = (py * pw2 + px) * c2
                    big[iy:iy + ksize, ix:ix + ksize, :, d, col:col + c2] = w2
    w2s = big.reshape(p1h * p1w * c1, 4 * g)
    b2grp = np.zeros((1, g), np.float32)
    b2grp[0, :ph2 * pw2 * c2] = np.tile(b2, ph2 * pw2)

    # fc1 rows: PyTorch NCHW flatten order (c2, py, px) -> kernel (py, px, c2).
    wd1r = wd1.reshape(c2, ph2, pw2, fc).transpose(1, 2, 0, 3)
    wd1p = np.zeros((g, fcpad), np.float32)
    wd1p[:ph2 * pw2 * c2, :fc] = wd1r.reshape(ph2 * pw2 * c2, fc)
    bd1p = np.zeros((1, fcpad), np.float32)
    bd1p[0, :fc] = bd1
    wd2p = np.zeros((fcpad, outpad), np.float32)
    wd2p[:fc, :ncls] = wd2
    bd2p = np.zeros((1, outpad), np.float32)
    bd2p[0, :ncls] = bd2

    cdt = jnp.dtype(compute_dtype)
    packed = {
        "w1bd": jnp.asarray(w1bd, cdt), "b1": jnp.asarray(b1big),
        "w2s": jnp.asarray(w2s, cdt), "b2": jnp.asarray(b2grp),
        "wd1": jnp.asarray(wd1p, cdt), "bd1": jnp.asarray(bd1p),
        "wd2": jnp.asarray(wd2p, cdt), "bd2": jnp.asarray(bd2p),
    }
    meta = Meta(ksize=int(ksize), cin=int(cin), c1=int(c1), c2=int(c2),
                p1h=int(p1h), p1w=int(p1w), ph2=int(ph2), pw2=int(pw2),
                g=int(g), kcol_pad=int(kcol_pad), fcpad=int(fcpad),
                outpad=int(outpad), ncls=int(ncls))
    return packed, meta


# ----------------------------------------------------------------------------
# Jitted forward: input im2col + ONE pallas_call
# ----------------------------------------------------------------------------
def _forward_impl(x_nchw, packed, meta):
    ksize, p1h, p1w, c1 = meta.ksize, meta.p1h, meta.p1w, meta.c1
    k1 = ksize * ksize * meta.cin
    cdt = packed["w1bd"].dtype

    n = x_nchw.shape[0]
    n_pad = _round_up(max(n, SUBLANE), SUBLANE)
    nb = min(n_pad, 128)                     # batch rows per grid step
    n_pad = _round_up(n_pad, nb)
    n_tiles = n_pad // nb

    # conv1 im2col, batch-tile-major rows: (tile | pool_offset, pooled_y, n),
    # cols (pooled_x, K1), zero-padded to kcol_pad lanes.
    x = jnp.transpose(x_nchw, (0, 2, 3, 1)).astype(jnp.float32)
    h, w = x.shape[1], x.shape[2]
    oh, ow = h - ksize + 1, w - ksize + 1
    cols = [x[:, kh:kh + oh, kw:kw + ow, :]
            for kh in range(ksize) for kw in range(ksize)]
    pt = jnp.stack(cols, axis=3).reshape(n, oh, ow, k1)
    pt = pt[:, :2 * p1h, :2 * p1w, :]                      # MaxPool2d(2) floor
    pt = pt.reshape(n, p1h, 2, p1w, 2, k1)
    pt = jnp.pad(pt, ((0, n_pad - n),) + ((0, 0),) * 5)
    pt = pt.reshape(n_tiles, nb, p1h, 2, p1w, 2, k1)
    pt = jnp.transpose(pt, (0, 3, 5, 2, 1, 4, 6))          # (t,dy,dx,y,n,x,k)
    a1 = pt.reshape(n_tiles * 4 * p1h * nb, p1w * k1)
    a1 = jnp.pad(a1, ((0, 0), (0, meta.kcol_pad - p1w * k1))).astype(cdt)

    # Cost / VMEM bookkeeping (all static).
    itemsize = cdt.itemsize
    k_conv2 = p1h * p1w * c1
    flops = 2 * n_tiles * (
        (4 * p1h * nb) * meta.kcol_pad * (p1w * c1)
        + nb * k_conv2 * (4 * meta.g)
        + nb * meta.g * meta.fcpad
        + nb * meta.fcpad * meta.outpad)
    wbytes = sum(int(np.prod(v.shape)) * v.dtype.itemsize for v in packed.values())
    a1_block_bytes = 4 * p1h * nb * meta.kcol_pad * itemsize
    out_block_bytes = nb * meta.outpad * 4
    inter_bytes = 4 * (4 * p1h * nb * p1w * c1 + nb * k_conv2
                       + nb * 4 * meta.g + nb * meta.fcpad)
    bytes_accessed = a1.size * itemsize + wbytes + n_pad * meta.outpad * 4
    vmem_limit = int(min(max(2 * (a1_block_bytes + out_block_bytes)
                             + wbytes + inter_bytes, 32 << 20), 64 << 20))

    kernel = functools.partial(fused_lenet5_kernel, nb=nb, p1h=p1h, g=meta.g)
    full = lambda s: pl.BlockSpec(s, lambda i: (0, 0))

    out = pl.pallas_call(
        kernel,
        out_shape=jax.ShapeDtypeStruct((n_pad, meta.outpad), jnp.float32),
        grid=(n_tiles,),
        in_specs=[
            pl.BlockSpec((4 * p1h * nb, meta.kcol_pad), lambda i: (i, 0)),
            full(packed["w1bd"].shape), full(packed["b1"].shape),
            full(packed["w2s"].shape), full(packed["b2"].shape),
            full(packed["wd1"].shape), full(packed["bd1"].shape),
            full(packed["wd2"].shape), full(packed["bd2"].shape),
        ],
        out_specs=pl.BlockSpec((nb, meta.outpad), lambda i: (i, 0)),
        compiler_params=pltpu.CompilerParams(
            dimension_semantics=("parallel",),
            vmem_limit_bytes=vmem_limit),
        cost_estimate=pl.CostEstimate(flops=flops, transcendentals=0,
                                      bytes_accessed=bytes_accessed),
    )(a1, packed["w1bd"], packed["b1"], packed["w2s"], packed["b2"],
      packed["wd1"], packed["bd1"], packed["wd2"], packed["bd2"])

    return out[:n, :meta.ncls]


trim_lenet5_forward = jax.jit(_forward_impl, static_argnums=(2,))


# ----------------------------------------------------------------------------
# Pure-JAX reference (no Pallas) for a sanity check
# ----------------------------------------------------------------------------
def reference_forward(x_nchw, params):
    def block(x, w, b):
        y = jax.lax.conv_general_dilated(
            x, w, (1, 1), "VALID", dimension_numbers=("NHWC", "HWIO", "NHWC"))
        y = jax.nn.relu(y + b)
        return jax.lax.reduce_window(
            y, -jnp.inf, jax.lax.max, (1, 2, 2, 1), (1, 2, 2, 1), "VALID")

    x = jnp.transpose(x_nchw, (0, 2, 3, 1)).astype(jnp.float32)
    x = block(x, params["w1"], params["b1"])
    x = block(x, params["w2"], params["b2"])
    x = jnp.transpose(x, (0, 3, 1, 2)).reshape(x.shape[0], -1)  # NCHW flatten
    x = jax.nn.relu(x @ params["wd1"] + params["bd1"])
    return x @ params["wd2"] + params["bd2"]


# ----------------------------------------------------------------------------
if __name__ == "__main__":
    key = jax.random.PRNGKey(0)
    ks = jax.random.split(key, 9)

    # Small, forward-consistent shapes:
    #   input_size=(4,16,16), conv_dims=[8,16], fc_dims=32, num_classes=10
    N, Cin, H, W = 2, 4, 16, 16
    conv_dims = [8, 16]
    fc_dims = 32
    num_classes = 10
    K = 5

    x = jax.random.normal(ks[0], (N, Cin, H, W), jnp.float32)

    # conv1(5x5)->12, pool->6, conv2(5x5)->2, pool->1 : flat_fts = 16*1*1
    flat_fts = conv_dims[1] * 1 * 1

    params = {
        "w1": 0.1 * jax.random.normal(ks[1], (K, K, Cin, conv_dims[0]), jnp.float32),
        "b1": 0.1 * jax.random.normal(ks[2], (conv_dims[0],), jnp.float32),
        "w2": 0.1 * jax.random.normal(ks[3], (K, K, conv_dims[0], conv_dims[1]), jnp.float32),
        "b2": 0.1 * jax.random.normal(ks[4], (conv_dims[1],), jnp.float32),
        "wd1": 0.1 * jax.random.normal(ks[5], (flat_fts, fc_dims), jnp.float32),
        "bd1": 0.1 * jax.random.normal(ks[6], (fc_dims,), jnp.float32),
        "wd2": 0.1 * jax.random.normal(ks[7], (fc_dims, num_classes), jnp.float32),
        "bd2": 0.1 * jax.random.normal(ks[8], (num_classes,), jnp.float32),
    }

    ref = jax.block_until_ready(reference_forward(x, params))

    # f32 MXU path: matches the PyTorch module's numerics.
    packed, meta = prepare_params(params, (Cin, H, W))           # one-time prep
    out = jax.block_until_ready(trim_lenet5_forward(x, packed, meta))
    assert out.shape == (N, num_classes), out.shape
    assert jnp.allclose(out, ref, atol=2e-3, rtol=2e-3), float(
        jnp.max(jnp.abs(out - ref)))

    # bf16 MXU operands, f32 accumulation (v6e/v7x recommendation).
    packed16, meta16 = prepare_params(params, (Cin, H, W),
                                      compute_dtype=jnp.bfloat16)
    out16 = jax.block_until_ready(trim_lenet5_forward(x, packed16, meta16))
    assert jnp.allclose(out16, ref, atol=3e-2, rtol=3e-2), float(
        jnp.max(jnp.abs(out16 - ref)))

    print("KERNEL_OK")
</pallas_src>

<mosaic_0001>
module attributes {stable_mosaic.version = 11 : i64} {
  func.func @fused_lenet5_kernel(%arg0: i32, %arg1: memref<192x640xf32, #tpu.memory_space<vmem>>, %arg2: memref<640x48xf32, #tpu.memory_space<vmem>>, %arg3: memref<1x48xf32, #tpu.memory_space<vmem>>, %arg4: memref<288x512xf32, #tpu.memory_space<vmem>>, %arg5: memref<1x128xf32, #tpu.memory_space<vmem>>, %arg6: memref<128x128xf32, #tpu.memory_space<vmem>>, %arg7: memref<1x128xf32, #tpu.memory_space<vmem>>, %arg8: memref<128x128xf32, #tpu.memory_space<vmem>>, %arg9: memref<1x128xf32, #tpu.memory_space<vmem>>, %arg10: memref<8x128xf32, #tpu.memory_space<vmem>>) attributes {dimension_semantics = [#tpu.dimension_semantics<parallel>], iteration_bounds = array<i64: 1>, scalar_prefetch = 0 : i64, scratch_operands = 0 : i64, tpu.core_type = #tpu.core_type<tc>, window_params = [{transform_indices = @transform_0, window_bounds = array<i64: 192, 640>}, {pipeline_mode = #tpu.pipeline_mode<synchronous>, transform_indices = @transform_1, window_bounds = array<i64: 640, 48>}, {pipeline_mode = #tpu.pipeline_mode<synchronous>, transform_indices = @transform_2, window_bounds = array<i64: 1, 48>}, {pipeline_mode = #tpu.pipeline_mode<synchronous>, transform_indices = @transform_3, window_bounds = array<i64: 288, 512>}, {pipeline_mode = #tpu.pipeline_mode<synchronous>, transform_indices = @transform_4, window_bounds = array<i64: 1, 128>}, {pipeline_mode = #tpu.pipeline_mode<synchronous>, transform_indices = @transform_5, window_bounds = array<i64: 128, 128>}, {pipeline_mode = #tpu.pipeline_mode<synchronous>, transform_indices = @transform_6, window_bounds = array<i64: 1, 128>}, {pipeline_mode = #tpu.pipeline_mode<synchronous>, transform_indices = @transform_7, window_bounds = array<i64: 128, 128>}, {pipeline_mode = #tpu.pipeline_mode<synchronous>, transform_indices = @transform_8, window_bounds = array<i64: 1, 128>}, {transform_indices = @transform_9, window_bounds = array<i64: 8, 128>}]} {
    %c0 = arith.constant 0 : index
    %c0_0 = arith.constant 0 : index
    %0 = vector.load %arg1[%c0, %c0_0] : memref<192x640xf32, #tpu.memory_space<vmem>>, vector<192x640xf32>
    %c0_1 = arith.constant 0 : index
    %c0_2 = arith.constant 0 : index
    %1 = vector.load %arg2[%c0_1, %c0_2] : memref<640x48xf32, #tpu.memory_space<vmem>>, vector<640x48xf32>
    %cst = arith.constant dense<0.000000e+00> : vector<192x48xf32>
    %2 = tpu.matmul %0, %1, %cst {dimension_numbers = #tpu.dot_dimension_numbers<[1], [0], [0], [1], [0, 0, 1, 1], [], []>} : vector<192x640xf32>, vector<640x48xf32>, vector<192x48xf32> -> vector<192x48xf32>
    %3 = vector.extract_strided_slice %2 {offsets = [0, 0], sizes = [48, 48], strides = [1, 1]} : vector<192x48xf32> to vector<48x48xf32>
    %4 = vector.extract_strided_slice %2 {offsets = [48, 0], sizes = [48, 48], strides = [1, 1]} : vector<192x48xf32> to vector<48x48xf32>
    %5 = arith.maximumf %3, %4 : vector<48x48xf32>
    %6 = vector.extract_strided_slice %2 {offsets = [96, 0], sizes = [48, 48], strides = [1, 1]} : vector<192x48xf32> to vector<48x48xf32>
    %7 = arith.maximumf %5, %6 : vector<48x48xf32>
    %8 = vector.extract_strided_slice %2 {offsets = [144, 0], sizes = [48, 48], strides = [1, 1]} : vector<192x48xf32> to vector<48x48xf32>
    %9 = arith.maximumf %7, %8 : vector<48x48xf32>
    %c0_3 = arith.constant 0 : index
    %c0_4 = arith.constant 0 : index
    %10 = vector.load %arg3[%c0_3, %c0_4] : memref<1x48xf32, #tpu.memory_space<vmem>>, vector<1x48xf32>
    %11 = vector.broadcast %10 : vector<1x48xf32> to vector<48x48xf32>
    %12 = arith.addf %9, %11 : vector<48x48xf32>
    %cst_5 = arith.constant 0.000000e+00 : f32
    %13 = vector.broadcast %cst_5 : f32 to vector<48x48xf32>
    %14 = arith.maximumf %12, %13 : vector<48x48xf32>
    %15 = vector.extract_strided_slice %14 {offsets = [0, 0], sizes = [8, 48], strides = [1, 1]} : vector<48x48xf32> to vector<8x48xf32>
    %16 = vector.extract_strided_slice %14 {offsets = [8, 0], sizes = [8, 48], strides = [1, 1]} : vector<48x48xf32> to vector<8x48xf32>
    %17 = vector.extract_strided_slice %14 {offsets = [16, 0], sizes = [8, 48], strides = [1, 1]} : vector<48x48xf32> to vector<8x48xf32>
    %18 = vector.extract_strided_slice %14 {offsets = [24, 0], sizes = [8, 48], strides = [1, 1]} : vector<48x48xf32> to vector<8x48xf32>
    %19 = vector.extract_strided_slice %14 {offsets = [32, 0], sizes = [8, 48], strides = [1, 1]} : vector<48x48xf32> to vector<8x48xf32>
    %20 = vector.extract_strided_slice %14 {offsets = [40, 0], sizes = [8, 48], strides = [1, 1]} : vector<48x48xf32> to vector<8x48xf32>
    %21 = tpu.concatenate %15, %16, %17, %18, %19, %20 in 1 : vector<8x48xf32>, vector<8x48xf32>, vector<8x48xf32>, vector<8x48xf32>, vector<8x48xf32>, vector<8x48xf32> -> vector<8x288xf32>
    %c0_6 = arith.constant 0 : index
    %c0_7 = arith.constant 0 : index
    %22 = vector.load %arg4[%c0_6, %c0_7] : memref<288x512xf32, #tpu.memory_space<vmem>>, vector<288x512xf32>
    %cst_8 = arith.constant dense<0.000000e+00> : vector<8x512xf32>
    %23 = tpu.matmul %21, %22, %cst_8 {dimension_numbers = #tpu.dot_dimension_numbers<[1], [0], [0], [1], [0, 0, 1, 1], [], []>} : vector<8x288xf32>, vector<288x512xf32>, vector<8x512xf32> -> vector<8x512xf32>
    %24 = vector.extract_strided_slice %23 {offsets = [0, 0], sizes = [8, 128], strides = [1, 1]} : vector<8x512xf32> to vector<8x128xf32>
    %25 = vector.extract_strided_slice %23 {offsets = [0, 128], sizes = [8, 128], strides = [1, 1]} : vector<8x512xf32> to vector<8x128xf32>
    %26 = arith.maximumf %24, %25 : vector<8x128xf32>
    %27 = vector.extract_strided_slice %23 {offsets = [0, 256], sizes = [8, 128], strides = [1, 1]} : vector<8x512xf32> to vector<8x128xf32>
    %28 = vector.extract_strided_slice %23 {offsets = [0, 384], sizes = [8, 128], strides = [1, 1]} : vector<8x512xf32> to vector<8x128xf32>
    %29 = arith.maximumf %27, %28 : vector<8x128xf32>
    %30 = arith.maximumf %26, %29 : vector<8x128xf32>
    %c0_9 = arith.constant 0 : index
    %c0_10 = arith.constant 0 : index
    %31 = vector.load %arg5[%c0_9, %c0_10] : memref<1x128xf32, #tpu.memory_space<vmem>>, vector<1x128xf32>
    %32 = vector.broadcast %31 : vector<1x128xf32> to vector<8x128xf32>
    %33 = arith.addf %30, %32 : vector<8x128xf32>
    %cst_11 = arith.constant 0.000000e+00 : f32
    %34 = vector.broadcast %cst_11 : f32 to vector<8x128xf32>
    %35 = arith.maximumf %33, %34 : vector<8x128xf32>
    %c0_12 = arith.constant 0 : index
    %c0_13 = arith.constant 0 : index
    %36 = vector.load %arg6[%c0_12, %c0_13] : memref<128x128xf32, #tpu.memory_space<vmem>>, vector<128x128xf32>
    %cst_14 = arith.constant dense<0.000000e+00> : vector<8x128xf32>
    %37 = tpu.matmul %35, %36, %cst_14 {dimension_numbers = #tpu.dot_dimension_numbers<[1], [0], [0], [1], [0, 0, 1, 1], [], []>} : vector<8x128xf32>, vector<128x128xf32>, vector<8x128xf32> -> vector<8x128xf32>
    %c0_15 = arith.constant 0 : index
    %c0_16 = arith.constant 0 : index
    %38 = vector.load %arg7[%c0_15, %c0_16] : memref<1x128xf32, #tpu.memory_space<vmem>>, vector<1x128xf32>
    %39 = vector.broadcast %38 : vector<1x128xf32> to vector<8x128xf32>
    %40 = arith.addf %37, %39 : vector<8x128xf32>
    %cst_17 = arith.constant 0.000000e+00 : f32
    %41 = vector.broadcast %cst_17 : f32 to vector<8x128xf32>
    %42 = arith.maximumf %40, %41 : vector<8x128xf32>
    %c0_18 = arith.constant 0 : index
    %c0_19 = arith.constant 0 : index
    %43 = vector.load %arg8[%c0_18, %c0_19] : memref<128x128xf32, #tpu.memory_space<vmem>>, vector<128x128xf32>
    %cst_20 = arith.constant dense<0.000000e+00> : vector<8x128xf32>
    %44 = tpu.matmul %42, %43, %cst_20 {dimension_numbers = #tpu.dot_dimension_numbers<[1], [0], [0], [1], [0, 0, 1, 1], [], []>} : vector<8x128xf32>, vector<128x128xf32>, vector<8x128xf32> -> vector<8x128xf32>
    %c0_21 = arith.constant 0 : index
    %c0_22 = arith.constant 0 : index
    %45 = vector.load %arg9[%c0_21, %c0_22] : memref<1x128xf32, #tpu.memory_space<vmem>>, vector<1x128xf32>
    %46 = vector.broadcast %45 : vector<1x128xf32> to vector<8x128xf32>
    %47 = arith.addf %44, %46 : vector<8x128xf32>
    %c0_23 = arith.constant 0 : index
    %c0_24 = arith.constant 0 : index
    %48 = vector.load %arg10[%c0_23, %c0_24] : memref<8x128xf32, #tpu.memory_space<vmem>>, vector<8x128xf32>
    tpu.vector_store %arg10[%c0_23, %c0_24], %47 {strides = array<i32>} : memref<8x128xf32, #tpu.memory_space<vmem>>, vector<8x128xf32>,
    return
  }
  func.func @transform_0(%arg0: i32) -> (i32, i32) {
    %c0_i32 = arith.constant 0 : i32
    %c0_i32_0 = arith.constant 0 : i32
    return %arg0, %c0_i32 : i32, i32
  }
  func.func @transform_1(%arg0: i32) -> (i32, i32) {
    %c0_i32 = arith.constant 0 : i32
    %c0_i32_0 = arith.constant 0 : i32
    %c0_i32_1 = arith.constant 0 : i32
    return %c0_i32, %c0_i32_0 : i32, i32
  }
  func.func @transform_2(%arg0: i32) -> (i32, i32) {
    %c0_i32 = arith.constant 0 : i32
    %c0_i32_0 = arith.constant 0 : i32
    %c0_i32_1 = arith.constant 0 : i32
    return %c0_i32, %c0_i32_0 : i32, i32
  }
  func.func @transform_3(%arg0: i32) -> (i32, i32) {
    %c0_i32 = arith.constant 0 : i32
    %c0_i32_0 = arith.constant 0 : i32
    %c0_i32_1 = arith.constant 0 : i32
    return %c0_i32, %c0_i32_0 : i32, i32
  }
  func.func @transform_4(%arg0: i32) -> (i32, i32) {
    %c0_i32 = arith.constant 0 : i32
    %c0_i32_0 = arith.constant 0 : i32
    %c0_i32_1 = arith.constant 0 : i32
    return %c0_i32, %c0_i32_0 : i32, i32
  }
  func.func @transform_5(%arg0: i32) -> (i32, i32) {
    %c0_i32 = arith.constant 0 : i32
    %c0_i32_0 = arith.constant 0 : i32
    %c0_i32_1 = arith.constant 0 : i32
    return %c0_i32, %c0_i32_0 : i32, i32
  }
  func.func @transform_6(%arg0: i32) -> (i32, i32) {
    %c0_i32 = arith.constant 0 : i32
    %c0_i32_0 = arith.constant 0 : i32
    %c0_i32_1 = arith.constant 0 : i32
    return %c0_i32, %c0_i32_0 : i32, i32
  }
  func.func @transform_7(%arg0: i32) -> (i32, i32) {
    %c0_i32 = arith.constant 0 : i32
    %c0_i32_0 = arith.constant 0 : i32
    %c0_i32_1 = arith.constant 0 : i32
    return %c0_i32, %c0_i32_0 : i32, i32
  }
  func.func @transform_8(%arg0: i32) -> (i32, i32) {
    %c0_i32 = arith.constant 0 : i32
    %c0_i32_0 = arith.constant 0 : i32
    %c0_i32_1 = arith.constant 0 : i32
    return %c0_i32, %c0_i32_0 : i32, i32
  }
  func.func @transform_9(%arg0: i32) -> (i32, i32) {
    %c0_i32 = arith.constant 0 : i32
    %c0_i32_0 = arith.constant 0 : i32
    return %arg0, %c0_i32 : i32, i32
  }
}

</mosaic_0001>

<llo_original>
// kernel: _forward_impl.1
$region0: #{_forward_impl.1}
  #allocation0 [shape = 'u32[]', space=smem, size = 0x4, offset = 0x4, fixed_abs, tag = 'smem constant byte address 0x4 - core index']
  #allocation1 [shape = 'u32[72,128]{1,0:T(1,128)}', space=vmem, size = 0x9000, scoped, tag = 'internal scratch']
  %s0 = inlined_call_operand.vmem [shape: f32[192,640], index: 0, kind: input, shape index: {}]
  %s1 = inlined_call_operand.vmem [shape: f32[640,48], index: 1, kind: input, shape index: {}]
  %s2 = inlined_call_operand.vmem [shape: f32[1,48], index: 2, kind: input, shape index: {}]
  %s3 = inlined_call_operand.vmem [shape: f32[288,512], index: 3, kind: input, shape index: {}]
  %s4 = inlined_call_operand.vmem [shape: f32[1,128], index: 4, kind: input, shape index: {}]
  %s5 = inlined_call_operand.vmem [shape: f32[128,128], index: 5, kind: input, shape index: {}]
  %s6 = inlined_call_operand.vmem [shape: f32[1,128], index: 6, kind: input, shape index: {}]
  %s7 = inlined_call_operand.vmem [shape: f32[128,128], index: 7, kind: input, shape index: {}]
  %s8 = inlined_call_operand.vmem [shape: f32[1,128], index: 8, kind: input, shape index: {}]
  %s9 = inlined_call_operand.vmem [shape: f32[8,128], index: 9, kind: output, shape index: {}]
  %s10 = sld [smem:[#allocation0]]
  $region46: #{_forward_impl.1} parent=0
    _
  %s12 = ssub.s32 1, %s10
  %s13 = scalar_select 0, %s12, %s10
  // Predicated region
  $region2: #{_forward_impl.1} parent=0 // pred_check
    _
  $region3: #{_forward_impl.1} parent=0 // pred_check_branch
    %15 = sbr.rel (0) target = $region5
  $region4: #{_forward_impl.1} parent=0 // pred_region
    _
  $region5: #{_forward_impl.1} parent=0 // pred_fallthru
    _
  // Predicated region
  $region6: #{_forward_impl.1} parent=0 // pred_check
    _
  $region7: #{_forward_impl.1} parent=0 // pred_check_branch
    %17 = sbr.rel (0) target = $region9
  $region8: #{_forward_impl.1} parent=0 // pred_region
    _
  $region9: #{_forward_impl.1} parent=0 // pred_fallthru
    _
  // Predicated region
  $region10: #{_forward_impl.1} parent=0 // pred_check
    _
  $region11: #{_forward_impl.1} parent=0 // pred_check_branch
    %19 = sbr.rel (0) target = $region13
  $region12: #{_forward_impl.1} parent=0 // pred_region
    _
  $region13: #{_forward_impl.1} parent=0 // pred_fallthru
    _
  // Predicated region
  $region14: #{_forward_impl.1} parent=0 // pred_check
    _
  $region15: #{_forward_impl.1} parent=0 // pred_check_branch
    %21 = sbr.rel (0) target = $region17
  $region16: #{_forward_impl.1} parent=0 // pred_region
    _
  $region17: #{_forward_impl.1} parent=0 // pred_fallthru
    _
  // Predicated region
  $region18: #{_forward_impl.1} parent=0 // pred_check
    _
  $region19: #{_forward_impl.1} parent=0 // pred_check_branch
    %23 = sbr.rel (0) target = $region21
  $region20: #{_forward_impl.1} parent=0 // pred_region
    _
  $region21: #{_forward_impl.1} parent=0 // pred_fallthru
    _
  // Predicated region
  $region22: #{_forward_impl.1} parent=0 // pred_check
    _
  $region23: #{_forward_impl.1} parent=0 // pred_check_branch
    %25 = sbr.rel (0) target = $region25
  $region24: #{_forward_impl.1} parent=0 // pred_region
    _
  $region25: #{_forward_impl.1} parent=0 // pred_fallthru
    _
  // Predicated region
  $region26: #{_forward_impl.1} parent=0 // pred_check
    _
  $region27: #{_forward_impl.1} parent=0 // pred_check_branch
    %27 = sbr.rel (0) target = $region29
  $region28: #{_forward_impl.1} parent=0 // pred_region
    _
  $region29: #{_forward_impl.1} parent=0 // pred_fallthru
    _
  // Predicated region
  $region30: #{_forward_impl.1} parent=0 // pred_check
    _
  $region31: #{_forward_impl.1} parent=0 // pred_check_branch
    %29 = sbr.rel (0) target = $region33
  $region32: #{_forward_impl.1} parent=0 // pred_region
    _
  $region33: #{_forward_impl.1} parent=0 // pred_fallthru
    _
  // Predicated region
  $region34: #{_forward_impl.1} parent=0 // pred_check
    _
  $region35: #{_forward_impl.1} parent=0 // pred_check_branch
    %31 = sbr.rel (0) target = $region37
  $region36: #{_forward_impl.1} parent=0 // pred_region
    _
  $region37: #{_forward_impl.1} parent=0 // pred_fallthru
    _
  %v32 = vld [vmem:[%s0] sm:$0xff]
  %v33 = vld [vmem:[%s0 + $0x8] sm:$0xff]
  %v34 = vld [vmem:[%s0 + $0x10] sm:$0xff]
  %v35 = vld [vmem:[%s0 + $0x18] sm:$0xff]
  %v36 = vld [vmem:[%s0 + $0x20] sm:$0xff]
  %v37 = vld [vmem:[%s0 + $0x28] sm:$0xff]
  %v38 = vld [vmem:[%s0 + $0x30] sm:$0xff]
  %v39 = vld [vmem:[%s0 + $0x38] sm:$0xff]
  %v40 = vld [vmem:[%s0 + $0x40] sm:$0xff]
  %v41 = vld [vmem:[%s0 + $0x48] sm:$0xff]
  %v42 = vld [vmem:[%s0 + $0x50] sm:$0xff]
  %v43 = vld [vmem:[%s0 + $0x58] sm:$0xff]
  %v44 = vld [vmem:[%s0 + $0x60] sm:$0xff]
  %v45 = vld [vmem:[%s0 + $0x68] sm:$0xff]
  %v46 = vld [vmem:[%s0 + $0x70] sm:$0xff]
  %v47 = vld [vmem:[%s0 + $0x78] sm:$0xff]
  %v48 = vld [vmem:[%s0 + $0x80] sm:$0xff]
  %v49 = vld [vmem:[%s0 + $0x88] sm:$0xff]
  %v50 = vld [vmem:[%s0 + $0x90] sm:$0xff]
  %v51 = vld [vmem:[%s0 + $0x98] sm:$0xff]
  %v52 = vld [vmem:[%s0 + $0xa0] sm:$0xff]
  %v53 = vld [vmem:[%s0 + $0xa8] sm:$0xff]
  %v54 = vld [vmem:[%s0 + $0xb0] sm:$0xff]
  %v55 = vld [vmem:[%s0 + $0xb8] sm:$0xff]
  %v56 = vld [vmem:[%s0 + $0xc0] sm:$0xff]
  %v57 = vld [vmem:[%s0 + $0xc8] sm:$0xff]
  %v58 = vld [vmem:[%s0 + $0xd0] sm:$0xff]
  %v59 = vld [vmem:[%s0 + $0xd8] sm:$0xff]
  %v60 = vld [vmem:[%s0 + $0xe0] sm:$0xff]
  %v61 = vld [vmem:[%s0 + $0xe8] sm:$0xff]
  %v62 = vld [vmem:[%s0 + $0xf0] sm:$0xff]
  %v63 = vld [vmem:[%s0 + $0xf8] sm:$0xff]
  %v64 = vld [vmem:[%s0 + $0x100] sm:$0xff]
  %v65 = vld [vmem:[%s0 + $0x108] sm:$0xff]
  %v66 = vld [vmem:[%s0 + $0x110] sm:$0xff]
  %v67 = vld [vmem:[%s0 + $0x118] sm:$0xff]
  %v68 = vld [vmem:[%s0 + $0x120] sm:$0xff]
  %v69 = vld [vmem:[%s0 + $0x128] sm:$0xff]
  %v70 = vld [vmem:[%s0 + $0x130] sm:$0xff]
  %v71 = vld [vmem:[%s0 + $0x138] sm:$0xff]
  %v72 = vld [vmem:[%s0 + $0x140] sm:$0xff]
  %v73 = vld [vmem:[%s0 + $0x148] sm:$0xff]
  %v74 = vld [vmem:[%s0 + $0x150] sm:$0xff]
  %v75 = vld [vmem:[%s0 + $0x158] sm:$0xff]
  %v76 = vld [vmem:[%s0 + $0x160] sm:$0xff]
  %v77 = vld [vmem:[%s0 + $0x168] sm:$0xff]
  %v78 = vld [vmem:[%s0 + $0x170] sm:$0xff]
  %v79 = vld [vmem:[%s0 + $0x178] sm:$0xff]
  %v80 = vld [vmem:[%s0 + $0x180] sm:$0xff]
  %v81 = vld [vmem:[%s0 + $0x188] sm:$0xff]
  %v82 = vld [vmem:[%s0 + $0x190] sm:$0xff]
  %v83 = vld [vmem:[%s0 + $0x198] sm:$0xff]
  %v84 = vld [vmem:[%s0 + $0x1a0] sm:$0xff]
  %v85 = vld [vmem:[%s0 + $0x1a8] sm:$0xff]
  %v86 = vld [vmem:[%s0 + $0x1b0] sm:$0xff]
  %v87 = vld [vmem:[%s0 + $0x1b8] sm:$0xff]
  %v88 = vld [vmem:[%s0 + $0x1c0] sm:$0xff]
  %v89 = vld [vmem:[%s0 + $0x1c8] sm:$0xff]
  %v90 = vld [vmem:[%s0 + $0x1d0] sm:$0xff]
  %v91 = vld [vmem:[%s0 + $0x1d8] sm:$0xff]
  %v92 = vld [vmem:[%s0 + $0x1e0] sm:$0xff]
  %v93 = vld [vmem:[%s0 + $0x1e8] sm:$0xff]
  %v94 = vld [vmem:[%s0 + $0x1f0] sm:$0xff]
  %v95 = vld [vmem:[%s0 + $0x1f8] sm:$0xff]
  %v96 = vld [vmem:[%s0 + $0x200] sm:$0xff]
  %v97 = vld [vmem:[%s0 + $0x208] sm:$0xff]
  %v98 = vld [vmem:[%s0 + $0x210] sm:$0xff]
  %v99 = vld [vmem:[%s0 + $0x218] sm:$0xff]
  %v100 = vld [vmem:[%s0 + $0x220] sm:$0xff]
  %v101 = vld [vmem:[%s0 + $0x228] sm:$0xff]
  %v102 = vld [vmem:[%s0 + $0x230] sm:$0xff]
  %v103 = vld [vmem:[%s0 + $0x238] sm:$0xff]
  %v104 = vld [vmem:[%s0 + $0x240] sm:$0xff]
  %v105 = vld [vmem:[%s0 + $0x248] sm:$0xff]
  %v106 = vld [vmem:[%s0 + $0x250] sm:$0xff]
  %v107 = vld [vmem:[%s0 + $0x258] sm:$0xff]
  %v108 = vld [vmem:[%s0 + $0x260] sm:$0xff]
  %v109 = vld [vmem:[%s0 + $0x268] sm:$0xff]
  %v110 = vld [vmem:[%s0 + $0x270] sm:$0xff]
  %v111 = vld [vmem:[%s0 + $0x278] sm:$0xff]
  %v112 = vld [vmem:[%s0 + $0x280] sm:$0xff]
  %v113 = vld [vmem:[%s0 + $0x288] sm:$0xff]
  %v114 = vld [vmem:[%s0 + $0x290] sm:$0xff]
  %v115 = vld [vmem:[%s0 + $0x298] sm:$0xff]
  %v116 = vld [vmem:[%s0 + $0x2a0] sm:$0xff]
  %v117 = vld [vmem:[%s0 + $0x2a8] sm:$0xff]
  %v118 = vld [vmem:[%s0 + $0x2b0] sm:$0xff]
  %v119 = vld [vmem:[%s0 + $0x2b8] sm:$0xff]
  %v120 = vld [vmem:[%s0 + $0x2c0] sm:$0xff]
  %v121 = vld [vmem:[%s0 + $0x2c8] sm:$0xff]
  %v122 = vld [vmem:[%s0 + $0x2d0] sm:$0xff]
  %v123 = vld [vmem:[%s0 + $0x2d8] sm:$0xff]
  %v124 = vld [vmem:[%s0 + $0x2e0] sm:$0xff]
  %v125 = vld [vmem:[%s0 + $0x2e8] sm:$0xff]
  %v126 = vld [vmem:[%s0 + $0x2f0] sm:$0xff]
  %v127 = vld [vmem:[%s0 + $0x2f8] sm:$0xff]
  %v128 = vld [vmem:[%s0 + $0x300] sm:$0xff]
  %v129 = vld [vmem:[%s0 + $0x308] sm:$0xff]
  %v130 = vld [vmem:[%s0 + $0x310] sm:$0xff]
  %v131 = vld [vmem:[%s0 + $0x318] sm:$0xff]
  %v132 = vld [vmem:[%s0 + $0x320] sm:$0xff]
  %v133 = vld [vmem:[%s0 + $0x328] sm:$0xff]
  %v134 = vld [vmem:[%s0 + $0x330] sm:$0xff]
  %v135 = vld [vmem:[%s0 + $0x338] sm:$0xff]
  %v136 = vld [vmem:[%s0 + $0x340] sm:$0xff]
  %v137 = vld [vmem:[%s0 + $0x348] sm:$0xff]
  %v138 = vld [vmem:[%s0 + $0x350] sm:$0xff]
  %v139 = vld [vmem:[%s0 + $0x358] sm:$0xff]
  %v140 = vld [vmem:[%s0 + $0x360] sm:$0xff]
  %v141 = vld [vmem:[%s0 + $0x368] sm:$0xff]
  %v142 = vld [vmem:[%s0 + $0x370] sm:$0xff]
  %v143 = vld [vmem:[%s0 + $0x378] sm:$0xff]
  %v144 = vld [vmem:[%s0 + $0x380] sm:$0xff]
  %v145 = vld [vmem:[%s0 + $0x388] sm:$0xff]
  %v146 = vld [vmem:[%s0 + $0x390] sm:$0xff]
  %v147 = vld [vmem:[%s0 + $0x398] sm:$0xff]
  %v148 = vld [vmem:[%s0 + $0x3a0] sm:$0xff]
  %v149 = vld [vmem:[%s0 + $0x3a8] sm:$0xff]
  %v150 = vld [vmem:[%s0 + $0x3b0] sm:$0xff]
  %v151 = vld [vmem:[%s0 + $0x3b8] sm:$0xff]
  %v152 = vld [vmem:[%s1] sm:$0xff]
  %v153 = vld [vmem:[%s1 + $0x8] sm:$0xff]
  %v154 = vld [vmem:[%s1 + $0x10] sm:$0xff]
  %v155 = vld [vmem:[%s1 + $0x18] sm:$0xff]
  %v156 = vld [vmem:[%s1 + $0x20] sm:$0xff]
  %v157 = vld [vmem:[%s1 + $0x28] sm:$0xff]
  %v158 = vld [vmem:[%s1 + $0x30] sm:$0xff]
  %v159 = vld [vmem:[%s1 + $0x38] sm:$0xff]
  %v160 = vld [vmem:[%s1 + $0x40] sm:$0xff]
  %v161 = vld [vmem:[%s1 + $0x48] sm:$0xff]
  %v162 = vld [vmem:[%s1 + $0x50] sm:$0xff]
  %v163 = vld [vmem:[%s1 + $0x58] sm:$0xff]
  %v164 = vld [vmem:[%s1 + $0x60] sm:$0xff]
  %v165 = vld [vmem:[%s1 + $0x68] sm:$0xff]
  %v166 = vld [vmem:[%s1 + $0x70] sm:$0xff]
  %v167 = vld [vmem:[%s1 + $0x78] sm:$0xff]
  %v168 = vld [vmem:[%s1 + $0x80] sm:$0xff]
  %v169 = vld [vmem:[%s1 + $0x88] sm:$0xff]
  %v170 = vld [vmem:[%s1 + $0x90] sm:$0xff]
  %v171 = vld [vmem:[%s1 + $0x98] sm:$0xff]
  %v172 = vld [vmem:[%s1 + $0xa0] sm:$0xff]
  %v173 = vld [vmem:[%s1 + $0xa8] sm:$0xff]
  %v174 = vld [vmem:[%s1 + $0xb0] sm:$0xff]
  %v175 = vld [vmem:[%s1 + $0xb8] sm:$0xff]
  %v176 = vld [vmem:[%s1 + $0xc0] sm:$0xff]
  %v177 = vld [vmem:[%s1 + $0xc8] sm:$0xff]
  %v178 = vld [vmem:[%s1 + $0xd0] sm:$0xff]
  %v179 = vld [vmem:[%s1 + $0xd8] sm:$0xff]
  %v180 = vld [vmem:[%s1 + $0xe0] sm:$0xff]
  %v181 = vld [vmem:[%s1 + $0xe8] sm:$0xff]
  %v182 = vld [vmem:[%s1 + $0xf0] sm:$0xff]
  %v183 = vld [vmem:[%s1 + $0xf8] sm:$0xff]
  %v184 = vld [vmem:[%s1 + $0x100] sm:$0xff]
  %v185 = vld [vmem:[%s1 + $0x108] sm:$0xff]
  %v186 = vld [vmem:[%s1 + $0x110] sm:$0xff]
  %v187 = vld [vmem:[%s1 + $0x118] sm:$0xff]
  %v188 = vld [vmem:[%s1 + $0x120] sm:$0xff]
  %v189 = vld [vmem:[%s1 + $0x128] sm:$0xff]
  %v190 = vld [vmem:[%s1 + $0x130] sm:$0xff]
  %v191 = vld [vmem:[%s1 + $0x138] sm:$0xff]
  %v192 = vld [vmem:[%s1 + $0x140] sm:$0xff]
  %v193 = vld [vmem:[%s1 + $0x148] sm:$0xff]
  %v194 = vld [vmem:[%s1 + $0x150] sm:$0xff]
  %v195 = vld [vmem:[%s1 + $0x158] sm:$0xff]
  %v196 = vld [vmem:[%s1 + $0x160] sm:$0xff]
  %v197 = vld [vmem:[%s1 + $0x168] sm:$0xff]
  %v198 = vld [vmem:[%s1 + $0x170] sm:$0xff]
  %v199 = vld [vmem:[%s1 + $0x178] sm:$0xff]
  %v200 = vld [vmem:[%s1 + $0x180] sm:$0xff]
  %v201 = vld [vmem:[%s1 + $0x188] sm:$0xff]
  %v202 = vld [vmem:[%s1 + $0x190] sm:$0xff]
  %v203 = vld [vmem:[%s1 + $0x198] sm:$0xff]
  %v204 = vld [vmem:[%s1 + $0x1a0] sm:$0xff]
  %v205 = vld [vmem:[%s1 + $0x1a8] sm:$0xff]
  %v206 = vld [vmem:[%s1 + $0x1b0] sm:$0xff]
  %v207 = vld [vmem:[%s1 + $0x1b8] sm:$0xff]
  %v208 = vld [vmem:[%s1 + $0x1c0] sm:$0xff]
  %v209 = vld [vmem:[%s1 + $0x1c8] sm:$0xff]
  %v210 = vld [vmem:[%s1 + $0x1d0] sm:$0xff]
  %v211 = vld [vmem:[%s1 + $0x1d8] sm:$0xff]
  %v212 = vld [vmem:[%s1 + $0x1e0] sm:$0xff]
  %v213 = vld [vmem:[%s1 + $0x1e8] sm:$0xff]
  %v214 = vld [vmem:[%s1 + $0x1f0] sm:$0xff]
  %v215 = vld [vmem:[%s1 + $0x1f8] sm:$0xff]
  %v216 = vld [vmem:[%s1 + $0x200] sm:$0xff]
  %v217 = vld [vmem:[%s1 + $0x208] sm:$0xff]
  %v218 = vld [vmem:[%s1 + $0x210] sm:$0xff]
  %v219 = vld [vmem:[%s1 + $0x218] sm:$0xff]
  %v220 = vld [vmem:[%s1 + $0x220] sm:$0xff]
  %v221 = vld [vmem:[%s1 + $0x228] sm:$0xff]
  %v222 = vld [vmem:[%s1 + $0x230] sm:$0xff]
  %v223 = vld [vmem:[%s1 + $0x238] sm:$0xff]
  %v224 = vld [vmem:[%s1 + $0x240] sm:$0xff]
  %v225 = vld [vmem:[%s1 + $0x248] sm:$0xff]
  %v226 = vld [vmem:[%s1 + $0x250] sm:$0xff]
  %v227 = vld [vmem:[%s1 + $0x258] sm:$0xff]
  %v228 = vld [vmem:[%s1 + $0x260] sm:$0xff]
  %v229 = vld [vmem:[%s1 + $0x268] sm:$0xff]
  %v230 = vld [vmem:[%s1 + $0x270] sm:$0xff]
  %v231 = vld [vmem:[%s1 + $0x278] sm:$0xff]
  %232 = vmatpush.msra.mxu0 %v167
  %233 = vmatpush.msra.mxu0 %v166
  %234 = vmatpush.msra.mxu0 %v165
  %235 = vmatpush.msra.mxu0 %v164
  %236 = vmatpush.msra.mxu0 %v163
  %237 = vmatpush.msra.mxu0 %v162
  %238 = vmatpush.msra.mxu0 %v161
  %239 = vmatpush.msra.mxu0 %v160
  %240 = vmatpush.msra.mxu0 %v159
  %241 = vmatpush.msra.mxu0 %v158
  %242 = vmatpush.msra.mxu0 %v157
  %243 = vmatpush.msra.mxu0 %v156
  %244 = vmatpush.msra.mxu0 %v155
  %245 = vmatpush.msra.mxu0 %v154
  %246 = vmatpush.msra.mxu0 %v153
  %247 = vmatpush.msra.mxu0 %v152
  %248 = vmatmul.f32.gmra.mxu0 %v32
  %v249 = vpop.f32.mrf.mxu0
  %v250 = vadd.f32 0.0, %v249
  %251 = vmatmul.f32.gmra.mxu0 %v37
  %v252 = vpop.f32.mrf.mxu0
  %v253 = vadd.f32 0.0, %v252
  %254 = vmatmul.f32.gmra.mxu0 %v42
  %v255 = vpop.f32.mrf.mxu0
  %v256 = vadd.f32 0.0, %v255
  %257 = vmatmul.f32.gmra.mxu0 %v47
  %v258 = vpop.f32.mrf.mxu0
  %v259 = vadd.f32 0.0, %v258
  %260 = vmatmul.f32.gmra.mxu0 %v52
  %v261 = vpop.f32.mrf.mxu0
  %v262 = vadd.f32 0.0, %v261
  %263 = vmatmul.f32.gmra.mxu0 %v57
  %v264 = vpop.f32.mrf.mxu0
  %v265 = vadd.f32 0.0, %v264
  %266 = vmatmul.f32.gmra.mxu0 %v62
  %v267 = vpop.f32.mrf.mxu0
  %v268 = vadd.f32 0.0, %v267
  %269 = vmatmul.f32.gmra.mxu0 %v67
  %v270 = vpop.f32.mrf.mxu0
  %v271 = vadd.f32 0.0, %v270
  %272 = vmatmul.f32.gmra.mxu0 %v72
  %v273 = vpop.f32.mrf.mxu0
  %v274 = vadd.f32 0.0, %v273
  %275 = vmatmul.f32.gmra.mxu0 %v77
  %v276 = vpop.f32.mrf.mxu0
  %v277 = vadd.f32 0.0, %v276
  %278 = vmatmul.f32.gmra.mxu0 %v82
  %v279 = vpop.f32.mrf.mxu0
  %v280 = vadd.f32 0.0, %v279
  %281 = vmatmul.f32.gmra.mxu0 %v87
  %v282 = vpop.f32.mrf.mxu0
  %v283 = vadd.f32 0.0, %v282
  %284 = vmatmul.f32.gmra.mxu0 %v92
  %v285 = vpop.f32.mrf.mxu0
  %v286 = vadd.f32 0.0, %v285
  %287 = vmatmul.f32.gmra.mxu0 %v97
  %v288 = vpop.f32.mrf.mxu0
  %v289 = vadd.f32 0.0, %v288
  %290 = vmatmul.f32.gmra.mxu0 %v102
  %v291 = vpop.f32.mrf.mxu0
  %v292 = vadd.f32 0.0, %v291
  %293 = vmatmul.f32.gmra.mxu0 %v107
  %v294 = vpop.f32.mrf.mxu0
  %v295 = vadd.f32 0.0, %v294
  %296 = vmatmul.f32.gmra.mxu0 %v112
  %v297 = vpop.f32.mrf.mxu0
  %v298 = vadd.f32 0.0, %v297
  %299 = vmatmul.f32.gmra.mxu0 %v117
  %v300 = vpop.f32.mrf.mxu0
  %v301 = vadd.f32 0.0, %v300
  %302 = vmatmul.f32.gmra.mxu0 %v122
  %v303 = vpop.f32.mrf.mxu0
  %v304 = vadd.f32 0.0, %v303
  %305 = vmatmul.f32.gmra.mxu0 %v127
  %v306 = vpop.f32.mrf.mxu0
  %v307 = vadd.f32 0.0, %v306
  %308 = vmatmul.f32.gmra.mxu0 %v132
  %v309 = vpop.f32.mrf.mxu0
  %v310 = vadd.f32 0.0, %v309
  %311 = vmatmul.f32.gmra.mxu0 %v137
  %v312 = vpop.f32.mrf.mxu0
  %v313 = vadd.f32 0.0, %v312
  %314 = vmatmul.f32.gmra.mxu0 %v142
  %v315 = vpop.f32.mrf.mxu0
  %v316 = vadd.f32 0.0, %v315
  %317 = vmatmul.f32.gmra.mxu0 %v147
  %v318 = vpop.f32.mrf.mxu0
  %v319 = vadd.f32 0.0, %v318
  %320 = vdwg.mxu0
  %321 = vmatpush.msra.mxu0 %v183
  %322 = vmatpush.msra.mxu0 %v182
  %323 = vmatpush.msra.mxu0 %v181
  %324 = vmatpush.msra.mxu0 %v180
  %325 = vmatpush.msra.mxu0 %v179
  %326 = vmatpush.msra.mxu0 %v178
  %327 = vmatpush.msra.mxu0 %v177
  %328 = vmatpush.msra.mxu0 %v176
  %329 = vmatpush.msra.mxu0 %v175
  %330 = vmatpush.msra.mxu0 %v174
  %331 = vmatpush.msra.mxu0 %v173
  %332 = vmatpush.msra.mxu0 %v172
  %333 = vmatpush.msra.mxu0 %v171
  %334 = vmatpush.msra.mxu0 %v170
  %335 = vmatpush.msra.mxu0 %v169
  %336 = vmatpush.msra.mxu0 %v168
  %337 = vmatmul.f32.gmra.mxu0 %v33
  %v338 = vpop.f32.mrf.mxu0
  %v339 = vadd.f32 %v250, %v338
  %340 = vmatmul.f32.gmra.mxu0 %v38
  %v341 = vpop.f32.mrf.mxu0
  %v342 = vadd.f32 %v253, %v341
  %343 = vmatmul.f32.gmra.mxu0 %v43
  %v344 = vpop.f32.mrf.mxu0
  %v345 = vadd.f32 %v256, %v344
  %346 = vmatmul.f32.gmra.mxu0 %v48
  %v347 = vpop.f32.mrf.mxu0
  %v348 = vadd.f32 %v259, %v347
  %349 = vmatmul.f32.gmra.mxu0 %v53
  %v350 = vpop.f32.mrf.mxu0
  %v351 = vadd.f32 %v262, %v350
  %352 = vmatmul.f32.gmra.mxu0 %v58
  %v353 = vpop.f32.mrf.mxu0
  %v354 = vadd.f32 %v265, %v353
  %355 = vmatmul.f32.gmra.mxu0 %v63
  %v356 = vpop.f32.mrf.mxu0
  %v357 = vadd.f32 %v268, %v356
  %358 = vmatmul.f32.gmra.mxu0 %v68
  %v359 = vpop.f32.mrf.mxu0
  %v360 = vadd.f32 %v271, %v359
  %361 = vmatmul.f32.gmra.mxu0 %v73
  %v362 = vpop.f32.mrf.mxu0
  %v363 = vadd.f32 %v274, %v362
  %364 = vmatmul.f32.gmra.mxu0 %v78
  %v365 = vpop.f32.mrf.mxu0
  %v366 = vadd.f32 %v277, %v365
  %367 = vmatmul.f32.gmra.mxu0 %v83
  %v368 = vpop.f32.mrf.mxu0
  %v369 = vadd.f32 %v280, %v368
  %370 = vmatmul.f32.gmra.mxu0 %v88
  %v371 = vpop.f32.mrf.mxu0
  %v372 = vadd.f32 %v283, %v371
  %373 = vmatmul.f32.gmra.mxu0 %v93
  %v374 = vpop.f32.mrf.mxu0
  %v375 = vadd.f32 %v286, %v374
  %376 = vmatmul.f32.gmra.mxu0 %v98
  %v377 = vpop.f32.mrf.mxu0
  %v378 = vadd.f32 %v289, %v377
  %379 = vmatmul.f32.gmra.mxu0 %v103
  %v380 = vpop.f32.mrf.mxu0
  %v381 = vadd.f32 %v292, %v380
  %382 = vmatmul.f32.gmra.mxu0 %v108
  %v383 = vpop.f32.mrf.mxu0
  %v384 = vadd.f32 %v295, %v383
  %385 = vmatmul.f32.gmra.mxu0 %v113
  %v386 = vpop.f32.mrf.mxu0
  %v387 = vadd.f32 %v298, %v386
  %388 = vmatmul.f32.gmra.mxu0 %v118
  %v389 = vpop.f32.mrf.mxu0
  %v390 = vadd.f32 %v301, %v389
  %391 = vmatmul.f32.gmra.mxu0 %v123
  %v392 = vpop.f32.mrf.mxu0
  %v393 = vadd.f32 %v304, %v392
  %394 = vmatmul.f32.gmra.mxu0 %v128
  %v395 = vpop.f32.mrf.mxu0
  %v396 = vadd.f32 %v307, %v395
  %397 = vmatmul.f32.gmra.mxu0 %v133
  %v398 = vpop.f32.mrf.mxu0
  %v399 = vadd.f32 %v310, %v398
  %400 = vmatmul.f32.gmra.mxu0 %v138
  %v401 = vpop.f32.mrf.mxu0
  %v402 = vadd.f32 %v313, %v401
  %403 = vmatmul.f32.gmra.mxu0 %v143
  %v404 = vpop.f32.mrf.mxu0
  %v405 = vadd.f32 %v316, %v404
  %406 = vmatmul.f32.gmra.mxu0 %v148
  %v407 = vpop.f32.mrf.mxu0
  %v408 = vadd.f32 %v319, %v407
  %409 = vdwg.mxu0
  %410 = vmatpush.msra.mxu0 %v199
  %411 = vmatpush.msra.mxu0 %v198
  %412 = vmatpush.msra.mxu0 %v197
  %413 = vmatpush.msra.mxu0 %v196
  %414 = vmatpush.msra.mxu0 %v195
  %415 = vmatpush.msra.mxu0 %v194
  %416 = vmatpush.msra.mxu0 %v193
  %417 = vmatpush.msra.mxu0 %v192
  %418 = vmatpush.msra.mxu0 %v191
  %419 = vmatpush.msra.mxu0 %v190
  %420 = vmatpush.msra.mxu0 %v189
  %421 = vmatpush.msra.mxu0 %v188
  %422 = vmatpush.msra.mxu0 %v187
  %423 = vmatpush.msra.mxu0 %v186
  %424 = vmatpush.msra.mxu0 %v185
  %425 = vmatpush.msra.mxu0 %v184
  %426 = vmatmul.f32.gmra.mxu0 %v34
  %v427 = vpop.f32.mrf.mxu0
  %v428 = vadd.f32 %v339, %v427
  %429 = vmatmul.f32.gmra.mxu0 %v39
  %v430 = vpop.f32.mrf.mxu0
  %v431 = vadd.f32 %v342, %v430
  %432 = vmatmul.f32.gmra.mxu0 %v44
  %v433 = vpop.f32.mrf.mxu0
  %v434 = vadd.f32 %v345, %v433
  %435 = vmatmul.f32.gmra.mxu0 %v49
  %v436 = vpop.f32.mrf.mxu0
  %v437 = vadd.f32 %v348, %v436
  %438 = vmatmul.f32.gmra.mxu0 %v54
  %v439 = vpop.f32.mrf.mxu0
  %v440 = vadd.f32 %v351, %v439
  %441 = vmatmul.f32.gmra.mxu0 %v59
  %v442 = vpop.f32.mrf.mxu0
  %v443 = vadd.f32 %v354, %v442
  %444 = vmatmul.f32.gmra.mxu0 %v64
  %v445 = vpop.f32.mrf.mxu0
  %v446 = vadd.f32 %v357, %v445
  %447 = vmatmul.f32.gmra.mxu0 %v69
  %v448 = vpop.f32.mrf.mxu0
  %v449 = vadd.f32 %v360, %v448
  %450 = vmatmul.f32.gmra.mxu0 %v74
  %v451 = vpop.f32.mrf.mxu0
  %v452 = vadd.f32 %v363, %v451
  %453 = vmatmul.f32.gmra.mxu0 %v79
  %v454 = vpop.f32.mrf.mxu0
  %v455 = vadd.f32 %v366, %v454
  %456 = vmatmul.f32.gmra.mxu0 %v84
  %v457 = vpop.f32.mrf.mxu0
  %v458 = vadd.f32 %v369, %v457
  %459 = vmatmul.f32.gmra.mxu0 %v89
  %v460 = vpop.f32.mrf.mxu0
  %v461 = vadd.f32 %v372, %v460
  %462 = vmatmul.f32.gmra.mxu0 %v94
  %v463 = vpop.f32.mrf.mxu0
  %v464 = vadd.f32 %v375, %v463
  %465 = vmatmul.f32.gmra.mxu0 %v99
  %v466 = vpop.f32.mrf.mxu0
  %v467 = vadd.f32 %v378, %v466
  %468 = vmatmul.f32.gmra.mxu0 %v104
  %v469 = vpop.f32.mrf.mxu0
  %v470 = vadd.f32 %v381, %v469
  %471 = vmatmul.f32.gmra.mxu0 %v109
  %v472 = vpop.f32.mrf.mxu0
  %v473 = vadd.f32 %v384, %v472
  %474 = vmatmul.f32.gmra.mxu0 %v114
  %v475 = vpop.f32.mrf.mxu0
  %v476 = vadd.f32 %v387, %v475
  %477 = vmatmul.f32.gmra.mxu0 %v119
  %v478 = vpop.f32.mrf.mxu0
  %v479 = vadd.f32 %v390, %v478
  %480 = vmatmul.f32.gmra.mxu0 %v124
  %v481 = vpop.f32.mrf.mxu0
  %v482 = vadd.f32 %v393, %v481
  %483 = vmatmul.f32.gmra.mxu0 %v129
  %v484 = vpop.f32.mrf.mxu0
  %v485 = vadd.f32 %v396, %v484
  %486 = vmatmul.f32.gmra.mxu0 %v134
  %v487 = vpop.f32.mrf.mxu0
  %v488 = vadd.f32 %v399, %v487
  %489 = vmatmul.f32.gmra.mxu0 %v139
  %v490 = vpop.f32.mrf.mxu0
  %v491 = vadd.f32 %v402, %v490
  %492 = vmatmul.f32.gmra.mxu0 %v144
  %v493 = vpop.f32.mrf.mxu0
  %v494 = vadd.f32 %v405, %v493
  %495 = vmatmul.f32.gmra.mxu0 %v149
  %v496 = vpop.f32.mrf.mxu0
  %v497 = vadd.f32 %v408, %v496
  %498 = vdwg.mxu0
  %499 = vmatpush.msra.mxu0 %v215
  %500 = vmatpush.msra.mxu0 %v214
  %501 = vmatpush.msra.mxu0 %v213
  %502 = vmatpush.msra.mxu0 %v212
  %503 = vmatpush.msra.mxu0 %v211
  %504 = vmatpush.msra.mxu0 %v210
  %505 = vmatpush.msra.mxu0 %v209
  %506 = vmatpush.msra.mxu0 %v208
  %507 = vmatpush.msra.mxu0 %v207
  %508 = vmatpush.msra.mxu0 %v206
  %509 = vmatpush.msra.mxu0 %v205
  %510 = vmatpush.msra.mxu0 %v204
  %511 = vmatpush.msra.mxu0 %v203
  %512 = vmatpush.msra.mxu0 %v202
  %513 = vmatpush.msra.mxu0 %v201
  %514 = vmatpush.msra.mxu0 %v200
  %515 = vmatmul.f32.gmra.mxu0 %v35
  %v516 = vpop.f32.mrf.mxu0
  %v517 = vadd.f32 %v428, %v516
  %518 = vmatmul.f32.gmra.mxu0 %v40
  %v519 = vpop.f32.mrf.mxu0
  %v520 = vadd.f32 %v431, %v519
  %521 = vmatmul.f32.gmra.mxu0 %v45
  %v522 = vpop.f32.mrf.mxu0
  %v523 = vadd.f32 %v434, %v522
  %524 = vmatmul.f32.gmra.mxu0 %v50
  %v525 = vpop.f32.mrf.mxu0
  %v526 = vadd.f32 %v437, %v525
  %527 = vmatmul.f32.gmra.mxu0 %v55
  %v528 = vpop.f32.mrf.mxu0
  %v529 = vadd.f32 %v440, %v528
  %530 = vmatmul.f32.gmra.mxu0 %v60
  %v531 = vpop.f32.mrf.mxu0
  %v532 = vadd.f32 %v443, %v531
  %533 = vmatmul.f32.gmra.mxu0 %v65
  %v534 = vpop.f32.mrf.mxu0
  %v535 = vadd.f32 %v446, %v534
  %536 = vmatmul.f32.gmra.mxu0 %v70
  %v537 = vpop.f32.mrf.mxu0
  %v538 = vadd.f32 %v449, %v537
  %539 = vmatmul.f32.gmra.mxu0 %v75
  %v540 = vpop.f32.mrf.mxu0
  %v541 = vadd.f32 %v452, %v540
  %542 = vmatmul.f32.gmra.mxu0 %v80
  %v543 = vpop.f32.mrf.mxu0
  %v544 = vadd.f32 %v455, %v543
  %545 = vmatmul.f32.gmra.mxu0 %v85
  %v546 = vpop.f32.mrf.mxu0
  %v547 = vadd.f32 %v458, %v546
  %548 = vmatmul.f32.gmra.mxu0 %v90
  %v549 = vpop.f32.mrf.mxu0
  %v550 = vadd.f32 %v461, %v549
  %551 = vmatmul.f32.gmra.mxu0 %v95
  %v552 = vpop.f32.mrf.mxu0
  %v553 = vadd.f32 %v464, %v552
  %554 = vmatmul.f32.gmra.mxu0 %v100
  %v555 = vpop.f32.mrf.mxu0
  %v556 = vadd.f32 %v467, %v555
  %557 = vmatmul.f32.gmra.mxu0 %v105
  %v558 = vpop.f32.mrf.mxu0
  %v559 = vadd.f32 %v470, %v558
  %560 = vmatmul.f32.gmra.mxu0 %v110
  %v561 = vpop.f32.mrf.mxu0
  %v562 = vadd.f32 %v473, %v561
  %563 = vmatmul.f32.gmra.mxu0 %v115
  %v564 = vpop.f32.mrf.mxu0
  %v565 = vadd.f32 %v476, %v564
  %566 = vmatmul.f32.gmra.mxu0 %v120
  %v567 = vpop.f32.mrf.mxu0
  %v568 = vadd.f32 %v479, %v567
  %569 = vmatmul.f32.gmra.mxu0 %v125
  %v570 = vpop.f32.mrf.mxu0
  %v571 = vadd.f32 %v482, %v570
  %572 = vmatmul.f32.gmra.mxu0 %v130
  %v573 = vpop.f32.mrf.mxu0
  %v574 = vadd.f32 %v485, %v573
  %575 = vmatmul.f32.gmra.mxu0 %v135
  %v576 = vpop.f32.mrf.mxu0
  %v577 = vadd.f32 %v488, %v576
  %578 = vmatmul.f32.gmra.mxu0 %v140
  %v579 = vpop.f32.mrf.mxu0
  %v580 = vadd.f32 %v491, %v579
  %581 = vmatmul.f32.gmra.mxu0 %v145
  %v582 = vpop.f32.mrf.mxu0
  %v583 = vadd.f32 %v494, %v582
  %584 = vmatmul.f32.gmra.mxu0 %v150
  %v585 = vpop.f32.mrf.mxu0
  %v586 = vadd.f32 %v497, %v585
  %587 = vdwg.mxu0
  %588 = vmatpush.msra.mxu0 %v231
  %589 = vmatpush.msra.mxu0 %v230
  %590 = vmatpush.msra.mxu0 %v229
  %591 = vmatpush.msra.mxu0 %v228
  %592 = vmatpush.msra.mxu0 %v227
  %593 = vmatpush.msra.mxu0 %v226
  %594 = vmatpush.msra.mxu0 %v225
  %595 = vmatpush.msra.mxu0 %v224
  %596 = vmatpush.msra.mxu0 %v223
  %597 = vmatpush.msra.mxu0 %v222
  %598 = vmatpush.msra.mxu0 %v221
  %599 = vmatpush.msra.mxu0 %v220
  %600 = vmatpush.msra.mxu0 %v219
  %601 = vmatpush.msra.mxu0 %v218
  %602 = vmatpush.msra.mxu0 %v217
  %603 = vmatpush.msra.mxu0 %v216
  %604 = vmatmul.f32.gmra.mxu0 %v36
  %v605 = vpop.f32.mrf.mxu0
  %v606 = vadd.f32 %v517, %v605
  %607 = vmatmul.f32.gmra.mxu0 %v41
  %v608 = vpop.f32.mrf.mxu0
  %v609 = vadd.f32 %v520, %v608
  %610 = vmatmul.f32.gmra.mxu0 %v46
  %v611 = vpop.f32.mrf.mxu0
  %v612 = vadd.f32 %v523, %v611
  %613 = vmatmul.f32.gmra.mxu0 %v51
  %v614 = vpop.f32.mrf.mxu0
  %v615 = vadd.f32 %v526, %v614
  %616 = vmatmul.f32.gmra.mxu0 %v56
  %v617 = vpop.f32.mrf.mxu0
  %v618 = vadd.f32 %v529, %v617
  %619 = vmatmul.f32.gmra.mxu0 %v61
  %v620 = vpop.f32.mrf.mxu0
  %v621 = vadd.f32 %v532, %v620
  %622 = vmatmul.f32.gmra.mxu0 %v66
  %v623 = vpop.f32.mrf.mxu0
  %v624 = vadd.f32 %v535, %v623
  %625 = vmatmul.f32.gmra.mxu0 %v71
  %v626 = vpop.f32.mrf.mxu0
  %v627 = vadd.f32 %v538, %v626
  %628 = vmatmul.f32.gmra.mxu0 %v76
  %v629 = vpop.f32.mrf.mxu0
  %v630 = vadd.f32 %v541, %v629
  %631 = vmatmul.f32.gmra.mxu0 %v81
  %v632 = vpop.f32.mrf.mxu0
  %v633 = vadd.f32 %v544, %v632
  %634 = vmatmul.f32.gmra.mxu0 %v86
  %v635 = vpop.f32.mrf.mxu0
  %v636 = vadd.f32 %v547, %v635
  %637 = vmatmul.f32.gmra.mxu0 %v91
  %v638 = vpop.f32.mrf.mxu0
  %v639 = vadd.f32 %v550, %v638
  %640 = vmatmul.f32.gmra.mxu0 %v96
  %v641 = vpop.f32.mrf.mxu0
  %v642 = vadd.f32 %v553, %v641
  %643 = vmatmul.f32.gmra.mxu0 %v101
  %v644 = vpop.f32.mrf.mxu0
  %v645 = vadd.f32 %v556, %v644
  %646 = vmatmul.f32.gmra.mxu0 %v106
  %v647 = vpop.f32.mrf.mxu0
  %v648 = vadd.f32 %v559, %v647
  %649 = vmatmul.f32.gmra.mxu0 %v111
  %v650 = vpop.f32.mrf.mxu0
  %v651 = vadd.f32 %v562, %v650
  %652 = vmatmul.f32.gmra.mxu0 %v116
  %v653 = vpop.f32.mrf.mxu0
  %v654 = vadd.f32 %v565, %v653
  %655 = vmatmul.f32.gmra.mxu0 %v121
  %v656 = vpop.f32.mrf.mxu0
  %v657 = vadd.f32 %v568, %v656
  %658 = vmatmul.f32.gmra.mxu0 %v126
  %v659 = vpop.f32.mrf.mxu0
  %v660 = vadd.f32 %v571, %v659
  %661 = vmatmul.f32.gmra.mxu0 %v131
  %v662 = vpop.f32.mrf.mxu0
  %v663 = vadd.f32 %v574, %v662
  %664 = vmatmul.f32.gmra.mxu0 %v136
  %v665 = vpop.f32.mrf.mxu0
  %v666 = vadd.f32 %v577, %v665
  %667 = vmatmul.f32.gmra.mxu0 %v141
  %v668 = vpop.f32.mrf.mxu0
  %v669 = vadd.f32 %v580, %v668
  %670 = vmatmul.f32.gmra.mxu0 %v146
  %v671 = vpop.f32.mrf.mxu0
  %v672 = vadd.f32 %v583, %v671
  %673 = vmatmul.f32.gmra.mxu0 %v151
  %v674 = vpop.f32.mrf.mxu0
  %v675 = vadd.f32 %v586, %v674
  %676 = vdwg.mxu0
  %v677 = vmax.f32 %v606, %v624
  %v678 = vmax.f32 %v609, %v627
  %v679 = vmax.f32 %v612, %v630
  %v680 = vmax.f32 %v615, %v633
  %v681 = vmax.f32 %v618, %v636
  %v682 = vmax.f32 %v621, %v639
  %v683 = vmax.f32 %v677, %v642
  %v684 = vmax.f32 %v678, %v645
  %v685 = vmax.f32 %v679, %v648
  %v686 = vmax.f32 %v680, %v651
  %v687 = vmax.f32 %v681, %v654
  %v688 = vmax.f32 %v682, %v657
  %v689 = vmax.f32 %v683, %v660
  %v690 = vmax.f32 %v684, %v663
  %v691 = vmax.f32 %v685, %v666
  %v692 = vmax.f32 %v686, %v669
  %v693 = vmax.f32 %v687, %v672
  %v694 = vmax.f32 %v688, %v675
  %v695 = vld [vmem:[%s2] sm:$0x1]
  %v697 = vperm.slane %v695, 0
  %v699 = vadd.f32 %v689, %v697
  %v700 = vadd.f32 %v690, %v697
  %v701 = vadd.f32 %v691, %v697
  %v702 = vadd.f32 %v692, %v697
  %v703 = vadd.f32 %v693, %v697
  %v704 = vadd.f32 %v694, %v697
  %v705 = vmax.f32 %v699, 0.0
  %v706 = vmax.f32 %v700, 0.0
  %v707 = vmax.f32 %v701, 0.0
  %v708 = vmax.f32 %v702, 0.0
  %v709 = vmax.f32 %v703, 0.0
  %v710 = vmax.f32 %v704, 0.0
  %712 = vrot.lane.b32.xlu0 %v706, 48
  %v713 = vpop.permute.xlu0 %712
  %716 = vrot.lane.b32.xlu0 %v707, 96
  %v717 = vpop.permute.xlu0 %716
  %720 = vrot.lane.b32.xlu0 %v708, 16
  %v721 = vpop.permute.xlu0 %720
  %724 = vrot.lane.b32.xlu0 %v709, 64
  %v725 = vpop.permute.xlu0 %724
  %728 = vrot.lane.b32.xlu0 %v710, 112
  %v729 = vpop.permute.xlu0 %728
  %vm731 = vcmask 392192
  %v732 = vsel %vm731, %v705, %v713
  %vm733 = vcmask 785408
  %v734 = vsel %vm733, %v732, %v717
  %vm735 = vcmask 130048
  %v736 = vsel %vm735, %v717, %v721
  %vm737 = vcmask 523264
  %v738 = vsel %vm737, %v736, %v725
  %vm739 = vcmask 916480
  %v740 = vsel %vm739, %v738, %v729
  %v741 = vld [vmem:[%s3] sm:$0xff]
  %v742 = vld [vmem:[%s3 + $0x8] sm:$0xff]
  %v743 = vld [vmem:[%s3 + $0x10] sm:$0xff]
  %v744 = vld [vmem:[%s3 + $0x18] sm:$0xff]
  %v745 = vld [vmem:[%s3 + $0x20] sm:$0xff]
  %v746 = vld [vmem:[%s3 + $0x28] sm:$0xff]
  %v747 = vld [vmem:[%s3 + $0x30] sm:$0xff]
  %v748 = vld [vmem:[%s3 + $0x38] sm:$0xff]
  %v749 = vld [vmem:[%s3 + $0x40] sm:$0xff]
  %v750 = vld [vmem:[%s3 + $0x48] sm:$0xff]
  %v751 = vld [vmem:[%s3 + $0x50] sm:$0xff]
  %v752 = vld [vmem:[%s3 + $0x58] sm:$0xff]
  %v753 = vld [vmem:[%s3 + $0x60] sm:$0xff]
  %v754 = vld [vmem:[%s3 + $0x68] sm:$0xff]
  %v755 = vld [vmem:[%s3 + $0x70] sm:$0xff]
  %v756 = vld [vmem:[%s3 + $0x78] sm:$0xff]
  %v757 = vld [vmem:[%s3 + $0x80] sm:$0xff]
  %v758 = vld [vmem:[%s3 + $0x88] sm:$0xff]
  %v759 = vld [vmem:[%s3 + $0x90] sm:$0xff]
  %v760 = vld [vmem:[%s3 + $0x98] sm:$0xff]
  %v761 = vld [vmem:[%s3 + $0xa0] sm:$0xff]
  %v762 = vld [vmem:[%s3 + $0xa8] sm:$0xff]
  %v763 = vld [vmem:[%s3 + $0xb0] sm:$0xff]
  %v764 = vld [vmem:[%s3 + $0xb8] sm:$0xff]
  %v765 = vld [vmem:[%s3 + $0xc0] sm:$0xff]
  %v766 = vld [vmem:[%s3 + $0xc8] sm:$0xff]
  %v767 = vld [vmem:[%s3 + $0xd0] sm:$0xff]
  %v768 = vld [vmem:[%s3 + $0xd8] sm:$0xff]
  %v769 = vld [vmem:[%s3 + $0xe0] sm:$0xff]
  %v770 = vld [vmem:[%s3 + $0xe8] sm:$0xff]
  %v771 = vld [vmem:[%s3 + $0xf0] sm:$0xff]
  %v772 = vld [vmem:[%s3 + $0xf8] sm:$0xff]
  %v773 = vld [vmem:[%s3 + $0x100] sm:$0xff]
  %v774 = vld [vmem:[%s3 + $0x108] sm:$0xff]
  %v775 = vld [vmem:[%s3 + $0x110] sm:$0xff]
  %v776 = vld [vmem:[%s3 + $0x118] sm:$0xff]
  %v777 = vld [vmem:[%s3 + $0x120] sm:$0xff]
  %v778 = vld [vmem:[%s3 + $0x128] sm:$0xff]
  %v779 = vld [vmem:[%s3 + $0x130] sm:$0xff]
  %v780 = vld [vmem:[%s3 + $0x138] sm:$0xff]
  %v781 = vld [vmem:[%s3 + $0x140] sm:$0xff]
  %v782 = vld [vmem:[%s3 + $0x148] sm:$0xff]
  %v783 = vld [vmem:[%s3 + $0x150] sm:$0xff]
  %v784 = vld [vmem:[%s3 + $0x158] sm:$0xff]
  %v785 = vld [vmem:[%s3 + $0x160] sm:$0xff]
  %v786 = vld [vmem:[%s3 + $0x168] sm:$0xff]
  %v787 = vld [vmem:[%s3 + $0x170] sm:$0xff]
  %v788 = vld [vmem:[%s3 + $0x178] sm:$0xff]
  %v789 = vld [vmem:[%s3 + $0x180] sm:$0xff]
  %v790 = vld [vmem:[%s3 + $0x188] sm:$0xff]
  %v791 = vld [vmem:[%s3 + $0x190] sm:$0xff]
  %v792 = vld [vmem:[%s3 + $0x198] sm:$0xff]
  %v793 = vld [vmem:[%s3 + $0x1a0] sm:$0xff]
  %v794 = vld [vmem:[%s3 + $0x1a8] sm:$0xff]
  %v795 = vld [vmem:[%s3 + $0x1b0] sm:$0xff]
  %v796 = vld [vmem:[%s3 + $0x1b8] sm:$0xff]
  %v797 = vld [vmem:[%s3 + $0x1c0] sm:$0xff]
  %v798 = vld [vmem:[%s3 + $0x1c8] sm:$0xff]
  %v799 = vld [vmem:[%s3 + $0x1d0] sm:$0xff]
  %v800 = vld [vmem:[%s3 + $0x1d8] sm:$0xff]
  %v801 = vld [vmem:[%s3 + $0x1e0] sm:$0xff]
  %v802 = vld [vmem:[%s3 + $0x1e8] sm:$0xff]
  %v803 = vld [vmem:[%s3 + $0x1f0] sm:$0xff]
  %v804 = vld [vmem:[%s3 + $0x1f8] sm:$0xff]
  %v805 = vld [vmem:[%s3 + $0x200] sm:$0xff]
  %v806 = vld [vmem:[%s3 + $0x208] sm:$0xff]
  %v807 = vld [vmem:[%s3 + $0x210] sm:$0xff]
  %v808 = vld [vmem:[%s3 + $0x218] sm:$0xff]
  %v809 = vld [vmem:[%s3 + $0x220] sm:$0xff]
  %v810 = vld [vmem:[%s3 + $0x228] sm:$0xff]
  %v811 = vld [vmem:[%s3 + $0x230] sm:$0xff]
  %v812 = vld [vmem:[%s3 + $0x238] sm:$0xff]
  %v813 = vld [vmem:[%s3 + $0x240] sm:$0xff]
  %v814 = vld [vmem:[%s3 + $0x248] sm:$0xff]
  %v815 = vld [vmem:[%s3 + $0x250] sm:$0xff]
  %v816 = vld [vmem:[%s3 + $0x258] sm:$0xff]
  %v817 = vld [vmem:[%s3 + $0x260] sm:$0xff]
  %v818 = vld [vmem:[%s3 + $0x268] sm:$0xff]
  %v819 = vld [vmem:[%s3 + $0x270] sm:$0xff]
  %v820 = vld [vmem:[%s3 + $0x278] sm:$0xff]
  %v821 = vld [vmem:[%s3 + $0x280] sm:$0xff]
  %v822 = vld [vmem:[%s3 + $0x288] sm:$0xff]
  %v823 = vld [vmem:[%s3 + $0x290] sm:$0xff]
  %v824 = vld [vmem:[%s3 + $0x298] sm:$0xff]
  %v825 = vld [vmem:[%s3 + $0x2a0] sm:$0xff]
  %v826 = vld [vmem:[%s3 + $0x2a8] sm:$0xff]
  %v827 = vld [vmem:[%s3 + $0x2b0] sm:$0xff]
  %v828 = vld [vmem:[%s3 + $0x2b8] sm:$0xff]
  %v829 = vld [vmem:[%s3 + $0x2c0] sm:$0xff]
  %v830 = vld [vmem:[%s3 + $0x2c8] sm:$0xff]
  %v831 = vld [vmem:[%s3 + $0x2d0] sm:$0xff]
  %v832 = vld [vmem:[%s3 + $0x2d8] sm:$0xff]
  %v833 = vld [vmem:[%s3 + $0x2e0] sm:$0xff]
  %v834 = vld [vmem:[%s3 + $0x2e8] sm:$0xff]
  %v835 = vld [vmem:[%s3 + $0x2f0] sm:$0xff]
  %v836 = vld [vmem:[%s3 + $0x2f8] sm:$0xff]
  %v837 = vld [vmem:[%s3 + $0x300] sm:$0xff]
  %v838 = vld [vmem:[%s3 + $0x308] sm:$0xff]
  %v839 = vld [vmem:[%s3 + $0x310] sm:$0xff]
  %v840 = vld [vmem:[%s3 + $0x318] sm:$0xff]
  %v841 = vld [vmem:[%s3 + $0x320] sm:$0xff]
  %v842 = vld [vmem:[%s3 + $0x328] sm:$0xff]
  %v843 = vld [vmem:[%s3 + $0x330] sm:$0xff]
  %v844 = vld [vmem:[%s3 + $0x338] sm:$0xff]
  %v845 = vld [vmem:[%s3 + $0x340] sm:$0xff]
  %v846 = vld [vmem:[%s3 + $0x348] sm:$0xff]
  %v847 = vld [vmem:[%s3 + $0x350] sm:$0xff]
  %v848 = vld [vmem:[%s3 + $0x358] sm:$0xff]
  %v849 = vld [vmem:[%s3 + $0x360] sm:$0xff]
  %v850 = vld [vmem:[%s3 + $0x368] sm:$0xff]
  %v851 = vld [vmem:[%s3 + $0x370] sm:$0xff]
  %v852 = vld [vmem:[%s3 + $0x378] sm:$0xff]
  %v853 = vld [vmem:[%s3 + $0x380] sm:$0xff]
  %v854 = vld [vmem:[%s3 + $0x388] sm:$0xff]
  %v855 = vld [vmem:[%s3 + $0x390] sm:$0xff]
  %v856 = vld [vmem:[%s3 + $0x398] sm:$0xff]
  %v857 = vld [vmem:[%s3 + $0x3a0] sm:$0xff]
  %v858 = vld [vmem:[%s3 + $0x3a8] sm:$0xff]
  %v859 = vld [vmem:[%s3 + $0x3b0] sm:$0xff]
  %v860 = vld [vmem:[%s3 + $0x3b8] sm:$0xff]
  %v861 = vld [vmem:[%s3 + $0x3c0] sm:$0xff]
  %v862 = vld [vmem:[%s3 + $0x3c8] sm:$0xff]
  %v863 = vld [vmem:[%s3 + $0x3d0] sm:$0xff]
  %v864 = vld [vmem:[%s3 + $0x3d8] sm:$0xff]
  %v865 = vld [vmem:[%s3 + $0x3e0] sm:$0xff]
  %v866 = vld [vmem:[%s3 + $0x3e8] sm:$0xff]
  %v867 = vld [vmem:[%s3 + $0x3f0] sm:$0xff]
  %v868 = vld [vmem:[%s3 + $0x3f8] sm:$0xff]
  %v869 = vld [vmem:[%s3 + $0x400] sm:$0xff]
  %v870 = vld [vmem:[%s3 + $0x408] sm:$0xff]
  %v871 = vld [vmem:[%s3 + $0x410] sm:$0xff]
  %v872 = vld [vmem:[%s3 + $0x418] sm:$0xff]
  %v873 = vld [vmem:[%s3 + $0x420] sm:$0xff]
  %v874 = vld [vmem:[%s3 + $0x428] sm:$0xff]
  %v875 = vld [vmem:[%s3 + $0x430] sm:$0xff]
  %v876 = vld [vmem:[%s3 + $0x438] sm:$0xff]
  %v877 = vld [vmem:[%s3 + $0x440] sm:$0xff]
  %v878 = vld [vmem:[%s3 + $0x448] sm:$0xff]
  %v879 = vld [vmem:[%s3 + $0x450] sm:$0xff]
  %v880 = vld [vmem:[%s3 + $0x458] sm:$0xff]
  %v881 = vld [vmem:[%s3 + $0x460] sm:$0xff]
  %v882 = vld [vmem:[%s3 + $0x468] sm:$0xff]
  %v883 = vld [vmem:[%s3 + $0x470] sm:$0xff]
  %v884 = vld [vmem:[%s3 + $0x478] sm:$0xff]
  %vm885 = vcmask 261120
  %v886 = vsel %vm885, %v729, 0
  %888 = vmatpush.msra.mxu0 %v801
  %889 = vmatpush.msra.mxu0 %v797
  %890 = vmatpush.msra.mxu0 %v793
  %891 = vmatpush.msra.mxu0 %v789
  %892 = vmatpush.msra.mxu0 %v785
  %893 = vmatpush.msra.mxu0 %v781
  %894 = vmatpush.msra.mxu0 %v777
  %895 = vmatpush.msra.mxu0 %v773
  %896 = vmatpush.msra.mxu0 %v769
  %897 = vmatpush.msra.mxu0 %v765
  %898 = vmatpush.msra.mxu0 %v761
  %899 = vmatpush.msra.mxu0 %v757
  %900 = vmatpush.msra.mxu0 %v753
  %901 = vmatpush.msra.mxu0 %v749
  %902 = vmatpush.msra.mxu0 %v745
  %903 = vmatpush.msra.mxu0 %v741
  %904 = vmatmul.f32.gmra.mxu0 %v734
  %v905 = vpop.f32.mrf.mxu0
  %v906 = vadd.f32 0.0, %v905
  %907 = vdwg.mxu0
  %908 = vmatpush.msra.mxu0 %v865
  %909 = vmatpush.msra.mxu0 %v861
  %910 = vmatpush.msra.mxu0 %v857
  %911 = vmatpush.msra.mxu0 %v853
  %912 = vmatpush.msra.mxu0 %v849
  %913 = vmatpush.msra.mxu0 %v845
  %914 = vmatpush.msra.mxu0 %v841
  %915 = vmatpush.msra.mxu0 %v837
  %916 = vmatpush.msra.mxu0 %v833
  %917 = vmatpush.msra.mxu0 %v829
  %918 = vmatpush.msra.mxu0 %v825
  %919 = vmatpush.msra.mxu0 %v821
  %920 = vmatpush.msra.mxu0 %v817
  %921 = vmatpush.msra.mxu0 %v813
  %922 = vmatpush.msra.mxu0 %v809
  %923 = vmatpush.msra.mxu0 %v805
  %924 = vmatmul.f32.gmra.mxu0 %v740
  %v925 = vpop.f32.mrf.mxu0
  %v926 = vadd.f32 %v906, %v925
  %927 = vdwg.mxu0
  %928 = vmatpush.msra.mxu0 0.0
  %929 = vmatpush.msra.mxu0 0.0
  %930 = vmatpush.msra.mxu0 0.0
  %931 = vmatpush.msra.mxu0 0.0
  %932 = vmatpush.msra.mxu0 0.0
  %933 = vmatpush.msra.mxu0 0.0
  %934 = vmatpush.msra.mxu0 0.0
  %935 = vmatpush.msra.mxu0 0.0
  %936 = vmatpush.msra.mxu0 0.0
  %937 = vmatpush.msra.mxu0 0.0
  %938 = vmatpush.msra.mxu0 0.0
  %939 = vmatpush.msra.mxu0 0.0
  %940 = vmatpush.msra.mxu0 %v881
  %941 = vmatpush.msra.mxu0 %v877
  %942 = vmatpush.msra.mxu0 %v873
  %943 = vmatpush.msra.mxu0 %v869
  %944 = vmatmul.f32.gmra.mxu0 %v886
  %v945 = vpop.f32.mrf.mxu0
  %v946 = vadd.f32 %v926, %v945
  %947 = vdwg.mxu0
  %948 = vmatpush.msra.mxu0 %v802
  %949 = vmatpush.msra.mxu0 %v798
  %950 = vmatpush.msra.mxu0 %v794
  %951 = vmatpush.msra.mxu0 %v790
  %952 = vmatpush.msra.mxu0 %v786
  %953 = vmatpush.msra.mxu0 %v782
  %954 = vmatpush.msra.mxu0 %v778
  %955 = vmatpush.msra.mxu0 %v774
  %956 = vmatpush.msra.mxu0 %v770
  %957 = vmatpush.msra.mxu0 %v766
  %958 = vmatpush.msra.mxu0 %v762
  %959 = vmatpush.msra.mxu0 %v758
  %960 = vmatpush.msra.mxu0 %v754
  %961 = vmatpush.msra.mxu0 %v750
  %962 = vmatpush.msra.mxu0 %v746
  %963 = vmatpush.msra.mxu0 %v742
  %964 = vmatmul.f32.gmra.mxu0 %v734
  %v965 = vpop.f32.mrf.mxu0
  %v966 = vadd.f32 0.0, %v965
  %967 = vdwg.mxu0
  %968 = vmatpush.msra.mxu0 %v866
  %969 = vmatpush.msra.mxu0 %v862
  %970 = vmatpush.msra.mxu0 %v858
  %971 = vmatpush.msra.mxu0 %v854
  %972 = vmatpush.msra.mxu0 %v850
  %973 = vmatpush.msra.mxu0 %v846
  %974 = vmatpush.msra.mxu0 %v842
  %975 = vmatpush.msra.mxu0 %v838
  %976 = vmatpush.msra.mxu0 %v834
  %977 = vmatpush.msra.mxu0 %v830
  %978 = vmatpush.msra.mxu0 %v826
  %979 = vmatpush.msra.mxu0 %v822
  %980 = vmatpush.msra.mxu0 %v818
  %981 = vmatpush.msra.mxu0 %v814
  %982 = vmatpush.msra.mxu0 %v810
  %983 = vmatpush.msra.mxu0 %v806
  %984 = vmatmul.f32.gmra.mxu0 %v740
  %v985 = vpop.f32.mrf.mxu0
  %v986 = vadd.f32 %v966, %v985
  %987 = vdwg.mxu0
  %988 = vmatpush.msra.mxu0 0.0
  %989 = vmatpush.msra.mxu0 0.0
  %990 = vmatpush.msra.mxu0 0.0
  %991 = vmatpush.msra.mxu0 0.0
  %992 = vmatpush.msra.mxu0 0.0
  %993 = vmatpush.msra.mxu0 0.0
  %994 = vmatpush.msra.mxu0 0.0
  %995 = vmatpush.msra.mxu0 0.0
  %996 = vmatpush.msra.mxu0 0.0
  %997 = vmatpush.msra.mxu0 0.0
  %998 = vmatpush.msra.mxu0 0.0
  %999 = vmatpush.msra.mxu0 0.0
  %1000 = vmatpush.msra.mxu0 %v882
  %1001 = vmatpush.msra.mxu0 %v878
  %1002 = vmatpush.msra.mxu0 %v874
  %1003 = vmatpush.msra.mxu0 %v870
  %1004 = vmatmul.f32.gmra.mxu0 %v886
  %v1005 = vpop.f32.mrf.mxu0
  %v1006 = vadd.f32 %v986, %v1005
  %1007 = vdwg.mxu0
  %1008 = vmatpush.msra.mxu0 %v803
  %1009 = vmatpush.msra.mxu0 %v799
  %1010 = vmatpush.msra.mxu0 %v795
  %1011 = vmatpush.msra.mxu0 %v791
  %1012 = vmatpush.msra.mxu0 %v787
  %1013 = vmatpush.msra.mxu0 %v783
  %1014 = vmatpush.msra.mxu0 %v779
  %1015 = vmatpush.msra.mxu0 %v775
  %1016 = vmatpush.msra.mxu0 %v771
  %1017 = vmatpush.msra.mxu0 %v767
  %1018 = vmatpush.msra.mxu0 %v763
  %1019 = vmatpush.msra.mxu0 %v759
  %1020 = vmatpush.msra.mxu0 %v755
  %1021 = vmatpush.msra.mxu0 %v751
  %1022 = vmatpush.msra.mxu0 %v747
  %1023 = vmatpush.msra.mxu0 %v743
  %1024 = vmatmul.f32.gmra.mxu0 %v734
  %v1025 = vpop.f32.mrf.mxu0
  %v1026 = vadd.f32 0.0, %v1025
  %1027 = vdwg.mxu0
  %1028 = vmatpush.msra.mxu0 %v867
  %1029 = vmatpush.msra.mxu0 %v863
  %1030 = vmatpush.msra.mxu0 %v859
  %1031 = vmatpush.msra.mxu0 %v855
  %1032 = vmatpush.msra.mxu0 %v851
  %1033 = vmatpush.msra.mxu0 %v847
  %1034 = vmatpush.msra.mxu0 %v843
  %1035 = vmatpush.msra.mxu0 %v839
  %1036 = vmatpush.msra.mxu0 %v835
  %1037 = vmatpush.msra.mxu0 %v831
  %1038 = vmatpush.msra.mxu0 %v827
  %1039 = vmatpush.msra.mxu0 %v823
  %1040 = vmatpush.msra.mxu0 %v819
  %1041 = vmatpush.msra.mxu0 %v815
  %1042 = vmatpush.msra.mxu0 %v811
  %1043 = vmatpush.msra.mxu0 %v807
  %1044 = vmatmul.f32.gmra.mxu0 %v740
  %v1045 = vpop.f32.mrf.mxu0
  %v1046 = vadd.f32 %v1026, %v1045
  %1047 = vdwg.mxu0
  %1048 = vmatpush.msra.mxu0 0.0
  %1049 = vmatpush.msra.mxu0 0.0
  %1050 = vmatpush.msra.mxu0 0.0
  %1051 = vmatpush.msra.mxu0 0.0
  %1052 = vmatpush.msra.mxu0 0.0
  %1053 = vmatpush.msra.mxu0 0.0
  %1054 = vmatpush.msra.mxu0 0.0
  %1055 = vmatpush.msra.mxu0 0.0
  %1056 = vmatpush.msra.mxu0 0.0
  %1057 = vmatpush.msra.mxu0 0.0
  %1058 = vmatpush.msra.mxu0 0.0
  %1059 = vmatpush.msra.mxu0 0.0
  %1060 = vmatpush.msra.mxu0 %v883
  %1061 = vmatpush.msra.mxu0 %v879
  %1062 = vmatpush.msra.mxu0 %v875
  %1063 = vmatpush.msra.mxu0 %v871
  %1064 = vmatmul.f32.gmra.mxu0 %v886
  %v1065 = vpop.f32.mrf.mxu0
  %v1066 = vadd.f32 %v1046, %v1065
  %1067 = vdwg.mxu0
  %1068 = vmatpush.msra.mxu0 %v804
  %1069 = vmatpush.msra.mxu0 %v800
  %1070 = vmatpush.msra.mxu0 %v796
  %1071 = vmatpush.msra.mxu0 %v792
  %1072 = vmatpush.msra.mxu0 %v788
  %1073 = vmatpush.msra.mxu0 %v784
  %1074 = vmatpush.msra.mxu0 %v780
  %1075 = vmatpush.msra.mxu0 %v776
  %1076 = vmatpush.msra.mxu0 %v772
  %1077 = vmatpush.msra.mxu0 %v768
  %1078 = vmatpush.msra.mxu0 %v764
  %1079 = vmatpush.msra.mxu0 %v760
  %1080 = vmatpush.msra.mxu0 %v756
  %1081 = vmatpush.msra.mxu0 %v752
  %1082 = vmatpush.msra.mxu0 %v748
  %1083 = vmatpush.msra.mxu0 %v744
  %1084 = vmatmul.f32.gmra.mxu0 %v734
  %v1085 = vpop.f32.mrf.mxu0
  %v1086 = vadd.f32 0.0, %v1085
  %1087 = vdwg.mxu0
  %1088 = vmatpush.msra.mxu0 %v868
  %1089 = vmatpush.msra.mxu0 %v864
  %1090 = vmatpush.msra.mxu0 %v860
  %1091 = vmatpush.msra.mxu0 %v856
  %1092 = vmatpush.msra.mxu0 %v852
  %1093 = vmatpush.msra.mxu0 %v848
  %1094 = vmatpush.msra.mxu0 %v844
  %1095 = vmatpush.msra.mxu0 %v840
  %1096 = vmatpush.msra.mxu0 %v836
  %1097 = vmatpush.msra.mxu0 %v832
  %1098 = vmatpush.msra.mxu0 %v828
  %1099 = vmatpush.msra.mxu0 %v824
  %1100 = vmatpush.msra.mxu0 %v820
  %1101 = vmatpush.msra.mxu0 %v816
  %1102 = vmatpush.msra.mxu0 %v812
  %1103 = vmatpush.msra.mxu0 %v808
  %1104 = vmatmul.f32.gmra.mxu0 %v740
  %v1105 = vpop.f32.mrf.mxu0
  %v1106 = vadd.f32 %v1086, %v1105
  %1107 = vdwg.mxu0
  %1108 = vmatpush.msra.mxu0 0.0
  %1109 = vmatpush.msra.mxu0 0.0
  %1110 = vmatpush.msra.mxu0 0.0
  %1111 = vmatpush.msra.mxu0 0.0
  %1112 = vmatpush.msra.mxu0 0.0
  %1113 = vmatpush.msra.mxu0 0.0
  %1114 = vmatpush.msra.mxu0 0.0
  %1115 = vmatpush.msra.mxu0 0.0
  %1116 = vmatpush.msra.mxu0 0.0
  %1117 = vmatpush.msra.mxu0 0.0
  %1118 = vmatpush.msra.mxu0 0.0
  %1119 = vmatpush.msra.mxu0 0.0
  %1120 = vmatpush.msra.mxu0 %v884
  %1121 = vmatpush.msra.mxu0 %v880
  %1122 = vmatpush.msra.mxu0 %v876
  %1123 = vmatpush.msra.mxu0 %v872
  %1124 = vmatmul.f32.gmra.mxu0 %v886
  %v1125 = vpop.f32.mrf.mxu0
  %v1126 = vadd.f32 %v1106, %v1125
  %1127 = vdwg.mxu0
  %v1128 = vmax.f32 %v946, %v1006
  %v1129 = vmax.f32 %v1066, %v1126
  %v1130 = vmax.f32 %v1128, %v1129
  %v1131 = vld [vmem:[%s4] sm:$0x1]
  %v1133 = vperm.slane %v1131, 0
  %v1135 = vadd.f32 %v1130, %v1133
  %v1136 = vmax.f32 %v1135, 0.0
  %v1137 = vld [vmem:[%s5] sm:$0xff]
  %v1138 = vld [vmem:[%s5 + $0x8] sm:$0xff]
  %v1139 = vld [vmem:[%s5 + $0x10] sm:$0xff]
  %v1140 = vld [vmem:[%s5 + $0x18] sm:$0xff]
  %v1141 = vld [vmem:[%s5 + $0x20] sm:$0xff]
  %v1142 = vld [vmem:[%s5 + $0x28] sm:$0xff]
  %v1143 = vld [vmem:[%s5 + $0x30] sm:$0xff]
  %v1144 = vld [vmem:[%s5 + $0x38] sm:$0xff]
  %v1145 = vld [vmem:[%s5 + $0x40] sm:$0xff]
  %v1146 = vld [vmem:[%s5 + $0x48] sm:$0xff]
  %v1147 = vld [vmem:[%s5 + $0x50] sm:$0xff]
  %v1148 = vld [vmem:[%s5 + $0x58] sm:$0xff]
  %v1149 = vld [vmem:[%s5 + $0x60] sm:$0xff]
  %v1150 = vld [vmem:[%s5 + $0x68] sm:$0xff]
  %v1151 = vld [vmem:[%s5 + $0x70] sm:$0xff]
  %v1152 = vld [vmem:[%s5 + $0x78] sm:$0xff]
  %v1153 = vld [vmem:[%s6] sm:$0x1]
  %v1155 = vperm.slane %v1153, 0
  %1157 = vmatpush.msra.mxu0 %v1152
  %1158 = vmatpush.msra.mxu0 %v1151
  %1159 = vmatpush.msra.mxu0 %v1150
  %1160 = vmatpush.msra.mxu0 %v1149
  %1161 = vmatpush.msra.mxu0 %v1148
  %1162 = vmatpush.msra.mxu0 %v1147
  %1163 = vmatpush.msra.mxu0 %v1146
  %1164 = vmatpush.msra.mxu0 %v1145
  %1165 = vmatpush.msra.mxu0 %v1144
  %1166 = vmatpush.msra.mxu0 %v1143
  %1167 = vmatpush.msra.mxu0 %v1142
  %1168 = vmatpush.msra.mxu0 %v1141
  %1169 = vmatpush.msra.mxu0 %v1140
  %1170 = vmatpush.msra.mxu0 %v1139
  %1171 = vmatpush.msra.mxu0 %v1138
  %1172 = vmatpush.msra.mxu0 %v1137
  %1173 = vmatmul.f32.gmra.mxu0 %v1136
  %v1174 = vpop.f32.mrf.mxu0
  %v1175 = vadd.f32 %v1155, %v1174
  %1176 = vdwg.mxu0
  %v1177 = vmax.f32 %v1175, 0.0
  %v1178 = vld [vmem:[%s7] sm:$0xff]
  %v1179 = vld [vmem:[%s7 + $0x8] sm:$0xff]
  %v1180 = vld [vmem:[%s7 + $0x10] sm:$0xff]
  %v1181 = vld [vmem:[%s7 + $0x18] sm:$0xff]
  %v1182 = vld [vmem:[%s7 + $0x20] sm:$0xff]
  %v1183 = vld [vmem:[%s7 + $0x28] sm:$0xff]
  %v1184 = vld [vmem:[%s7 + $0x30] sm:$0xff]
  %v1185 = vld [vmem:[%s7 + $0x38] sm:$0xff]
  %v1186 = vld [vmem:[%s7 + $0x40] sm:$0xff]
  %v1187 = vld [vmem:[%s7 + $0x48] sm:$0xff]
  %v1188 = vld [vmem:[%s7 + $0x50] sm:$0xff]
  %v1189 = vld [vmem:[%s7 + $0x58] sm:$0xff]
  %v1190 = vld [vmem:[%s7 + $0x60] sm:$0xff]
  %v1191 = vld [vmem:[%s7 + $0x68] sm:$0xff]
  %v1192 = vld [vmem:[%s7 + $0x70] sm:$0xff]
  %v1193 = vld [vmem:[%s7 + $0x78] sm:$0xff]
  %v1194 = vld [vmem:[%s8] sm:$0x1]
  %v1196 = vperm.slane %v1194, 0
  %1198 = vmatpush.msra.mxu0 %v1193
  %1199 = vmatpush.msra.mxu0 %v1192
  %1200 = vmatpush.msra.mxu0 %v1191
  %1201 = vmatpush.msra.mxu0 %v1190
  %1202 = vmatpush.msra.mxu0 %v1189
  %1203 = vmatpush.msra.mxu0 %v1188
  %1204 = vmatpush.msra.mxu0 %v1187
  %1205 = vmatpush.msra.mxu0 %v1186
  %1206 = vmatpush.msra.mxu0 %v1185
  %1207 = vmatpush.msra.mxu0 %v1184
  %1208 = vmatpush.msra.mxu0 %v1183
  %1209 = vmatpush.msra.mxu0 %v1182
  %1210 = vmatpush.msra.mxu0 %v1181
  %1211 = vmatpush.msra.mxu0 %v1180
  %1212 = vmatpush.msra.mxu0 %v1179
  %1213 = vmatpush.msra.mxu0 %v1178
  %1214 = vmatmul.f32.gmra.mxu0 %v1177
  %v1215 = vpop.f32.mrf.mxu0
  %v1216 = vadd.f32 %v1196, %v1215
  %1217 = vdwg.mxu0
  %1218 = vst [vmem:[%s9] sm:$0xff] %v1216
  // Predicated region
  $region38: #{_forward_impl.1} parent=0 // pred_check
    _
  $region39: #{_forward_impl.1} parent=0 // pred_check_branch
    %1220 = sbr.rel (0) target = $region41
  $region40: #{_forward_impl.1} parent=0 // pred_region
    _
  $region41: #{_forward_impl.1} parent=0 // pred_fallthru
    _
  // Predicated region
  $region42: #{_forward_impl.1} parent=0 // pred_check
    _
  $region43: #{_forward_impl.1} parent=0 // pred_check_branch
    %1222 = sbr.rel (0) target = $region45
  $region44: #{_forward_impl.1} parent=0 // pred_region
    _
  $region45: #{_forward_impl.1} parent=0 // pred_fallthru
    _

</llo_original>
